<compile_context>
chip_gen: v7x
topology: tpu7x:2x2x1
jax: 0.10.0
libtpu: 0.0.40
codegen_flags: <defaults>
</compile_context>

<pallas_src>
import functools
import math

import jax
import jax.numpy as jnp
from jax.experimental import pallas as pl
from jax.experimental.pallas import tpu as pltpu

# Keep XLA-side matmuls/convs (reference + style FCs) in true f32 so the
# correctness check against the Pallas kernel is tight.
jax.config.update("jax_default_matmul_precision", "highest")


def _lane_shift(v, amt):
    """Cyclic lane rotation: out[..., p] = v[..., (p + amt) % n] (static amt)."""
    n = v.shape[-1]
    k = amt % n
    if k == 0:
        return v
    return jnp.concatenate([v[..., k:], v[..., :k]], axis=-1)


def _row_shift_reflect(a, H, W, dh):
    """out[:, i*W+j] = a[:, refl(i+dh)*W + j]  (reflection pad 1, dh in {-1,0,1})."""
    if dh == 0:
        return a
    if dh == -1:
        # row -1 -> row 1 ; rows 1..H-1 <- rows 0..H-2
        return jnp.concatenate([a[:, W:2 * W], a[:, :(H - 1) * W]], axis=-1)
    # dh == +1: rows 0..H-2 <- rows 1..H-1 ; row H-1 -> row H-2
    return jnp.concatenate([a[:, W:], a[:, (H - 2) * W:(H - 1) * W]], axis=-1)


def _col_shift_reflect(r, j_idx, W, dw):
    """out[:, i*W+j] = r[:, i*W + refl(j+dw)]  (reflection pad 1, dw in {-1,0,1})."""
    if dw == 0:
        return r
    main = _lane_shift(r, dw)    # r[:, p + dw]; only wrong on the masked border lanes
    refl = _lane_shift(r, -dw)   # r[:, p - dw] = reflected neighbour at the border
    bad = (j_idx == (W - 1)) if dw == 1 else (j_idx == 0)
    return jnp.where(bad, refl, main)


def _im2col_reflect3x3(a, j_idx, H, W):
    """(C, H*W) -> (9*C, H*W) im2col for a 3x3 conv with reflection padding 1.

    Row order is (kh, kw)-major / channel-minor, matching
    weight.transpose(0, 2, 3, 1).reshape(Cout, 9*Cin).
    """
    taps = []
    for dh in (-1, 0, 1):
        r = _row_shift_reflect(a, H, W, dh)
        for dw in (-1, 0, 1):
            taps.append(_col_shift_reflect(r, j_idx, W, dw))
    return jnp.concatenate(taps, axis=0)


def _adain_act(v, gamma, beta, eps, slope):
    """InstanceNorm over the lane (H*W) axis + (1+gamma)*. + beta + LeakyReLU."""
    mean = jnp.mean(v, axis=-1, keepdims=True)
    ctr = v - mean
    var = jnp.mean(ctr * ctr, axis=-1, keepdims=True)
    h = (1.0 + gamma) * (ctr * jax.lax.rsqrt(var + eps)) + beta
    return jnp.where(h >= 0, h, slope * h)


def _adain_resblk_kernel(x_ref, g1_ref, b1_ref, g2_ref, b2_ref,
                         w1_ref, c1b_ref, w2_ref, c2b_ref, wsc_ref, o_ref,
                         *, H, W, eps, slope):
    # x_ref : (1, Cin, H*W)    lane-dense activations for one batch element
    # g*/b* : (1, C, 1)        AdaIN gamma/beta (already computed by the style FC)
    # w1    : (Cout, 9*Cin)    conv1 weights in im2col form;  c1b: (Cout, 1)
    # w2    : (Cout, 9*Cout)   conv2 weights in im2col form;  c2b: (Cout, 1)
    # wsc   : (Cout, Cin)      1x1 shortcut conv (bias-free)
    # o_ref : (1, Cout, H*W)
    x = x_ref[0].astype(jnp.float32)                                   # (Cin, HW)
    j_idx = jax.lax.broadcasted_iota(jnp.int32, (1, H * W), 1) % W

    # AdaIN1 + LeakyReLU + conv1 (reflect pad 1) as one im2col matmul.
    a1 = _adain_act(x, g1_ref[0], b1_ref[0], eps, slope)               # (Cin, HW)
    col1 = _im2col_reflect3x3(a1, j_idx, H, W)                         # (9*Cin, HW)
    y1 = jnp.dot(w1_ref[...], col1,
                 preferred_element_type=jnp.float32) + c1b_ref[...]    # (Cout, HW)

    # AdaIN2 + LeakyReLU + conv2 (reflect pad 1).
    a2 = _adain_act(y1, g2_ref[0], b2_ref[0], eps, slope)              # (Cout, HW)
    col2 = _im2col_reflect3x3(a2, j_idx, H, W)                         # (9*Cout, HW)
    y2 = jnp.dot(w2_ref[...], col2,
                 preferred_element_type=jnp.float32) + c2b_ref[...]    # (Cout, HW)

    # Learned 1x1 shortcut on the ORIGINAL x, residual add, / sqrt(2).
    sc = jnp.dot(wsc_ref[...], x, preferred_element_type=jnp.float32)  # (Cout, HW)
    o_ref[0] = ((y2 + sc) * (1.0 / math.sqrt(2.0))).astype(o_ref.dtype)


def adain_resblk(x, s, params, *, eps=1e-5, negative_slope=0.2):
    """AdainResBlk forward.  x: (N, Cin, H, W) f32, s: (N, style_dim) f32."""
    fc1_w, fc1_b = params["fc1_w"], params["fc1_b"]        # (2*Cin, S), (2*Cin,)
    fc2_w, fc2_b = params["fc2_w"], params["fc2_b"]        # (2*Cout, S), (2*Cout,)
    conv1_w, conv1_b = params["conv1_w"], params["conv1_b"]  # (Cout, Cin, 3, 3), (Cout,)
    conv2_w, conv2_b = params["conv2_w"], params["conv2_b"]  # (Cout, Cout, 3, 3), (Cout,)
    sc_w = params.get("sc_w")                                # (Cout, Cin, 1, 1) or None

    N, Cin, H, W = x.shape
    Cout = conv1_w.shape[0]
    HW = H * W
    assert conv1_w.shape[2:] == (3, 3) and conv2_w.shape[2:] == (3, 3)

    # Tiny style MLPs stay in XLA; only (N, C, 1) gamma/beta tensors feed the kernel.
    h1 = jnp.dot(s, fc1_w.T) + fc1_b                        # (N, 2*Cin)
    g1 = h1[:, :Cin].reshape(N, Cin, 1)
    b1 = h1[:, Cin:].reshape(N, Cin, 1)
    h2 = jnp.dot(s, fc2_w.T) + fc2_b                        # (N, 2*Cout)
    g2 = h2[:, :Cout].reshape(N, Cout, 1)
    b2 = h2[:, Cout:].reshape(N, Cout, 1)

    # Conv weights in im2col-matmul form (tap-major, channel-minor rows).
    w1m = jnp.transpose(conv1_w, (0, 2, 3, 1)).reshape(Cout, 9 * Cin)
    w2m = jnp.transpose(conv2_w, (0, 2, 3, 1)).reshape(Cout, 9 * Cout)
    c1b = conv1_b.reshape(Cout, 1)
    c2b = conv2_b.reshape(Cout, 1)
    if sc_w is None:
        wscm = jnp.eye(Cout, Cin, dtype=x.dtype)            # identity shortcut (dim_in == dim_out)
    else:
        wscm = sc_w.reshape(Cout, Cin)

    # NCHW is already channel-major; collapsing (H, W) is free and lane-dense.
    x_flat = x.reshape(N, Cin, HW)

    kernel = functools.partial(_adain_resblk_kernel, H=H, W=W,
                               eps=eps, slope=negative_slope)
    out_flat = pl.pallas_call(
        kernel,
        out_shape=jax.ShapeDtypeStruct((N, Cout, HW), x.dtype),
        grid_spec=pltpu.PrefetchScalarGridSpec(
            num_scalar_prefetch=0,
            grid=(N,),
            in_specs=[
                pl.BlockSpec((1, Cin, HW), lambda n: (n, 0, 0)),
                pl.BlockSpec((1, Cin, 1), lambda n: (n, 0, 0)),
                pl.BlockSpec((1, Cin, 1), lambda n: (n, 0, 0)),
                pl.BlockSpec((1, Cout, 1), lambda n: (n, 0, 0)),
                pl.BlockSpec((1, Cout, 1), lambda n: (n, 0, 0)),
                pl.BlockSpec((Cout, 9 * Cin), lambda n: (0, 0)),
                pl.BlockSpec((Cout, 1), lambda n: (0, 0)),
                pl.BlockSpec((Cout, 9 * Cout), lambda n: (0, 0)),
                pl.BlockSpec((Cout, 1), lambda n: (0, 0)),
                pl.BlockSpec((Cout, Cin), lambda n: (0, 0)),
            ],
            out_specs=pl.BlockSpec((1, Cout, HW), lambda n: (n, 0, 0)),
        ),
        compiler_params=pltpu.CompilerParams(
            dimension_semantics=("parallel",)),   # batch axis -> both TCs on v7x
    )(x_flat, g1, b1, g2, b2, w1m, c1b, w2m, c2b, wscm)

    return out_flat.reshape(N, Cout, H, W)


def _reference(x, s, params, *, eps=1e-5, negative_slope=0.2):
    """Pure-JAX mirror of the PyTorch AdainResBlk forward."""
    def adain(v, gamma, beta):
        mean = jnp.mean(v, axis=(2, 3), keepdims=True)
        var = jnp.mean((v - mean) ** 2, axis=(2, 3), keepdims=True)
        vn = (v - mean) / jnp.sqrt(var + eps)
        return (1.0 + gamma) * vn + beta

    def leaky(v):
        return jnp.where(v >= 0, v, negative_slope * v)

    def conv_layer(v, w, b):
        vp = jnp.pad(v, ((0, 0), (0, 0), (1, 1), (1, 1)), mode="reflect")
        y = jax.lax.conv_general_dilated(
            vp, w, window_strides=(1, 1), padding="VALID",
            dimension_numbers=("NCHW", "OIHW", "NCHW"))
        return y + b.reshape(1, -1, 1, 1)

    Cin = x.shape[1]
    Cout = params["conv1_w"].shape[0]
    h1 = s @ params["fc1_w"].T + params["fc1_b"]
    g1, b1 = h1[:, :Cin, None, None], h1[:, Cin:, None, None]
    h2 = s @ params["fc2_w"].T + params["fc2_b"]
    g2, b2 = h2[:, :Cout, None, None], h2[:, Cout:, None, None]

    r = adain(x, g1, b1)
    r = leaky(r)
    r = conv_layer(r, params["conv1_w"], params["conv1_b"])
    r = adain(r, g2, b2)
    r = leaky(r)
    r = conv_layer(r, params["conv2_w"], params["conv2_b"])

    sc_w = params.get("sc_w")
    if sc_w is None:
        sc = x
    else:
        sc = jax.lax.conv_general_dilated(
            x, sc_w, window_strides=(1, 1), padding="VALID",
            dimension_numbers=("NCHW", "OIHW", "NCHW"))
    return (r + sc) / math.sqrt(2.0)


if __name__ == "__main__":
    # Small shapes consistent with the module: batch=2, dim_in=4, dim_out=8
    # (exercises the learned 1x1 shortcut), style_dim=64, spatial 16x16.
    N, dim_in, dim_out, style_dim, H, W = 2, 4, 8, 64, 16, 16

    key = jax.random.PRNGKey(0)
    keys = jax.random.split(key, 11)

    def uniform(k, shape, bound):
        return jax.random.uniform(k, shape, jnp.float32, minval=-bound, maxval=bound)

    x = jax.random.normal(keys[0], (N, dim_in, H, W), dtype=jnp.float32)
    s = jax.random.normal(keys[1], (N, style_dim), dtype=jnp.float32)

    fc_bound = 1.0 / math.sqrt(style_dim)
    c1_bound = 1.0 / math.sqrt(dim_in * 9)
    c2_bound = 1.0 / math.sqrt(dim_out * 9)
    sc_bound = 1.0 / math.sqrt(dim_in)
    params = {
        "fc1_w": uniform(keys[2], (2 * dim_in, style_dim), fc_bound),
        "fc1_b": uniform(keys[3], (2 * dim_in,), fc_bound),
        "fc2_w": uniform(keys[4], (2 * dim_out, style_dim), fc_bound),
        "fc2_b": uniform(keys[5], (2 * dim_out,), fc_bound),
        "conv1_w": uniform(keys[6], (dim_out, dim_in, 3, 3), c1_bound),
        "conv1_b": uniform(keys[7], (dim_out,), c1_bound),
        "conv2_w": uniform(keys[8], (dim_out, dim_out, 3, 3), c2_bound),
        "conv2_b": uniform(keys[9], (dim_out,), c2_bound),
        "sc_w": uniform(keys[10], (dim_out, dim_in, 1, 1), sc_bound),
    }

    out = jax.block_until_ready(adain_resblk(x, s, params))
    ref = jax.block_until_ready(_reference(x, s, params))

    assert out.shape == (N, dim_out, H, W), out.shape
    max_err = float(jnp.max(jnp.abs(out - ref)))
    assert jnp.allclose(out, ref, atol=1e-4, rtol=1e-4), max_err

    print("KERNEL_OK")
</pallas_src>

<mosaic_0001>
module attributes {stable_mosaic.version = 11 : i64} {
  func.func @_adain_resblk_kernel(%arg0: i32, %arg1: memref<1x4x256xf32, #tpu.memory_space<vmem>>, %arg2: memref<1x4x1xf32, #tpu.memory_space<vmem>>, %arg3: memref<1x4x1xf32, #tpu.memory_space<vmem>>, %arg4: memref<1x8x1xf32, #tpu.memory_space<vmem>>, %arg5: memref<1x8x1xf32, #tpu.memory_space<vmem>>, %arg6: memref<8x36xf32, #tpu.memory_space<vmem>>, %arg7: memref<8x1xf32, #tpu.memory_space<vmem>>, %arg8: memref<8x72xf32, #tpu.memory_space<vmem>>, %arg9: memref<8x1xf32, #tpu.memory_space<vmem>>, %arg10: memref<8x4xf32, #tpu.memory_space<vmem>>, %arg11: memref<1x8x256xf32, #tpu.memory_space<vmem>>) attributes {dimension_semantics = [#tpu.dimension_semantics<parallel>], iteration_bounds = array<i64: 2>, scalar_prefetch = 0 : i64, scratch_operands = 0 : i64, tpu.core_type = #tpu.core_type<tc>, window_params = [{transform_indices = @transform_0, window_bounds = array<i64: 1, 4, 256>}, {transform_indices = @transform_1, window_bounds = array<i64: 1, 4, 1>}, {transform_indices = @transform_2, window_bounds = array<i64: 1, 4, 1>}, {transform_indices = @transform_3, window_bounds = array<i64: 1, 8, 1>}, {transform_indices = @transform_4, window_bounds = array<i64: 1, 8, 1>}, {pipeline_mode = #tpu.pipeline_mode<synchronous>, transform_indices = @transform_5, window_bounds = array<i64: 8, 36>}, {pipeline_mode = #tpu.pipeline_mode<synchronous>, transform_indices = @transform_6, window_bounds = array<i64: 8, 1>}, {pipeline_mode = #tpu.pipeline_mode<synchronous>, transform_indices = @transform_7, window_bounds = array<i64: 8, 72>}, {pipeline_mode = #tpu.pipeline_mode<synchronous>, transform_indices = @transform_8, window_bounds = array<i64: 8, 1>}, {pipeline_mode = #tpu.pipeline_mode<synchronous>, transform_indices = @transform_9, window_bounds = array<i64: 8, 4>}, {transform_indices = @transform_10, window_bounds = array<i64: 1, 8, 256>}]} {
    %c0 = arith.constant 0 : index
    %c0_0 = arith.constant 0 : index
    %c0_1 = arith.constant 0 : index
    %0 = vector.load %arg1[%c0, %c0_0, %c0_1] : memref<1x4x256xf32, #tpu.memory_space<vmem>>, vector<1x4x256xf32>
    %1 = vector.shape_cast %0 : vector<1x4x256xf32> to vector<4x256xf32>
    %2 = tpu.iota {dimensions = array<i32: 1>} : vector<1x256xi32>
    %c16_i32 = arith.constant 16 : i32
    %c0_i32 = arith.constant 0 : i32
    %3 = arith.cmpi eq, %c16_i32, %c0_i32 : i32
    %c1_i32 = arith.constant 1 : i32
    %4 = arith.select %3, %c1_i32, %c16_i32 : i32
    %5 = vector.broadcast %4 : i32 to vector<1x256xi32>
    %6 = arith.remsi %2, %5 : vector<1x256xi32>
    %c0_i32_2 = arith.constant 0 : i32
    %7 = vector.broadcast %c0_i32_2 : i32 to vector<1x256xi32>
    %8 = arith.cmpi ne, %6, %7 : vector<1x256xi32>
    %c0_i32_3 = arith.constant 0 : i32
    %9 = vector.broadcast %c0_i32_3 : i32 to vector<1x256xi32>
    %10 = arith.cmpi slt, %6, %9 : vector<1x256xi32>
    %c0_i32_4 = arith.constant 0 : i32
    %11 = arith.cmpi slt, %4, %c0_i32_4 : i32
    %12 = vector.broadcast %11 : i1 to vector<1x256xi1>
    %13 = vector.broadcast %12 : vector<1x256xi1> to vector<1x256xi1>
    %14 = arith.xori %10, %13 : vector<1x256xi1>
    %15 = arith.andi %14, %8 : vector<1x256xi1>
    %16 = vector.broadcast %4 : i32 to vector<1x256xi32>
    %17 = arith.addi %6, %16 : vector<1x256xi32>
    %18 = arith.select %15, %17, %6 : vector<1x256xi1>, vector<1x256xi32>
    %c0_5 = arith.constant 0 : index
    %c0_6 = arith.constant 0 : index
    %c0_7 = arith.constant 0 : index
    %19 = vector.load %arg2[%c0_5, %c0_6, %c0_7] : memref<1x4x1xf32, #tpu.memory_space<vmem>>, vector<1x4x1xf32>
    %20 = vector.shape_cast %19 : vector<1x4x1xf32> to vector<4x1xf32>
    %c0_8 = arith.constant 0 : index
    %c0_9 = arith.constant 0 : index
    %c0_10 = arith.constant 0 : index
    %21 = vector.load %arg3[%c0_8, %c0_9, %c0_10] : memref<1x4x1xf32, #tpu.memory_space<vmem>>, vector<1x4x1xf32>
    %22 = vector.shape_cast %21 : vector<1x4x1xf32> to vector<4x1xf32>
    %cst = arith.constant dense<0.000000e+00> : vector<4xf32>
    %23 = vector.multi_reduction <add>, %1, %cst [1] : vector<4x256xf32> to vector<4xf32>
    %24 = vector.shape_cast %23 : vector<4xf32> to vector<4x1xf32>
    %cst_11 = arith.constant 2.560000e+02 : f32
    %25 = vector.broadcast %cst_11 : f32 to vector<4x1xf32>
    %26 = arith.divf %24, %25 : vector<4x1xf32>
    %27 = vector.broadcast %26 : vector<4x1xf32> to vector<4x256xf32>
    %28 = arith.subf %1, %27 : vector<4x256xf32>
    %29 = arith.mulf %28, %28 : vector<4x256xf32>
    %cst_12 = arith.constant dense<0.000000e+00> : vector<4xf32>
    %30 = vector.multi_reduction <add>, %29, %cst_12 [1] : vector<4x256xf32> to vector<4xf32>
    %31 = vector.shape_cast %30 : vector<4xf32> to vector<4x1xf32>
    %cst_13 = arith.constant 2.560000e+02 : f32
    %32 = vector.broadcast %cst_13 : f32 to vector<4x1xf32>
    %33 = arith.divf %31, %32 : vector<4x1xf32>
    %cst_14 = arith.constant 1.000000e+00 : f32
    %34 = vector.broadcast %cst_14 : f32 to vector<4x1xf32>
    %35 = arith.addf %34, %20 : vector<4x1xf32>
    %cst_15 = arith.constant 9.99999974E-6 : f32
    %36 = vector.broadcast %cst_15 : f32 to vector<4x1xf32>
    %37 = arith.addf %33, %36 : vector<4x1xf32>
    %38 = math.rsqrt %37 : vector<4x1xf32>
    %39 = vector.broadcast %38 : vector<4x1xf32> to vector<4x256xf32>
    %40 = arith.mulf %28, %39 : vector<4x256xf32>
    %41 = vector.broadcast %35 : vector<4x1xf32> to vector<4x256xf32>
    %42 = arith.mulf %41, %40 : vector<4x256xf32>
    %43 = vector.broadcast %22 : vector<4x1xf32> to vector<4x256xf32>
    %44 = arith.addf %42, %43 : vector<4x256xf32>
    %cst_16 = arith.constant 0.000000e+00 : f32
    %45 = vector.broadcast %cst_16 : f32 to vector<4x256xf32>
    %46 = arith.cmpf oge, %44, %45 : vector<4x256xf32>
    %cst_17 = arith.constant 2.000000e-01 : f32
    %47 = vector.broadcast %cst_17 : f32 to vector<4x256xf32>
    %48 = arith.mulf %47, %44 : vector<4x256xf32>
    %49 = arith.select %46, %44, %48 : vector<4x256xi1>, vector<4x256xf32>
    %50 = vector.extract_strided_slice %49 {offsets = [0, 16], sizes = [4, 16], strides = [1, 1]} : vector<4x256xf32> to vector<4x16xf32>
    %51 = vector.extract_strided_slice %49 {offsets = [0, 0], sizes = [4, 240], strides = [1, 1]} : vector<4x256xf32> to vector<4x240xf32>
    %52 = tpu.concatenate %50, %51 in 1 : vector<4x16xf32>, vector<4x240xf32> -> vector<4x256xf32>
    %53 = vector.extract_strided_slice %52 {offsets = [0, 255], sizes = [4, 1], strides = [1, 1]} : vector<4x256xf32> to vector<4x1xf32>
    %54 = vector.extract_strided_slice %52 {offsets = [0, 0], sizes = [4, 255], strides = [1, 1]} : vector<4x256xf32> to vector<4x255xf32>
    %55 = tpu.concatenate %53, %54 in 1 : vector<4x1xf32>, vector<4x255xf32> -> vector<4x256xf32>
    %56 = vector.extract_strided_slice %52 {offsets = [0, 1], sizes = [4, 255], strides = [1, 1]} : vector<4x256xf32> to vector<4x255xf32>
    %57 = vector.extract_strided_slice %52 {offsets = [0, 0], sizes = [4, 1], strides = [1, 1]} : vector<4x256xf32> to vector<4x1xf32>
    %58 = tpu.concatenate %56, %57 in 1 : vector<4x255xf32>, vector<4x1xf32> -> vector<4x256xf32>
    %c0_i32_18 = arith.constant 0 : i32
    %59 = vector.broadcast %c0_i32_18 : i32 to vector<1x256xi32>
    %60 = arith.cmpi eq, %18, %59 : vector<1x256xi32>
    %61 = vector.shape_cast %60 : vector<1x256xi1> to vector<1x256xi1>
    %62 = vector.broadcast %61 : vector<1x256xi1> to vector<4x256xi1>
    %63 = arith.select %62, %58, %55 : vector<4x256xi1>, vector<4x256xf32>
    %64 = vector.extract_strided_slice %52 {offsets = [0, 1], sizes = [4, 255], strides = [1, 1]} : vector<4x256xf32> to vector<4x255xf32>
    %65 = vector.extract_strided_slice %52 {offsets = [0, 0], sizes = [4, 1], strides = [1, 1]} : vector<4x256xf32> to vector<4x1xf32>
    %66 = tpu.concatenate %64, %65 in 1 : vector<4x255xf32>, vector<4x1xf32> -> vector<4x256xf32>
    %67 = vector.extract_strided_slice %52 {offsets = [0, 255], sizes = [4, 1], strides = [1, 1]} : vector<4x256xf32> to vector<4x1xf32>
    %68 = vector.extract_strided_slice %52 {offsets = [0, 0], sizes = [4, 255], strides = [1, 1]} : vector<4x256xf32> to vector<4x255xf32>
    %69 = tpu.concatenate %67, %68 in 1 : vector<4x1xf32>, vector<4x255xf32> -> vector<4x256xf32>
    %c15_i32 = arith.constant 15 : i32
    %70 = vector.broadcast %c15_i32 : i32 to vector<1x256xi32>
    %71 = arith.cmpi eq, %18, %70 : vector<1x256xi32>
    %72 = vector.shape_cast %71 : vector<1x256xi1> to vector<1x256xi1>
    %73 = vector.broadcast %72 : vector<1x256xi1> to vector<4x256xi1>
    %74 = arith.select %73, %69, %66 : vector<4x256xi1>, vector<4x256xf32>
    %75 = vector.extract_strided_slice %49 {offsets = [0, 255], sizes = [4, 1], strides = [1, 1]} : vector<4x256xf32> to vector<4x1xf32>
    %76 = vector.extract_strided_slice %49 {offsets = [0, 0], sizes = [4, 255], strides = [1, 1]} : vector<4x256xf32> to vector<4x255xf32>
    %77 = tpu.concatenate %75, %76 in 1 : vector<4x1xf32>, vector<4x255xf32> -> vector<4x256xf32>
    %78 = vector.extract_strided_slice %49 {offsets = [0, 1], sizes = [4, 255], strides = [1, 1]} : vector<4x256xf32> to vector<4x255xf32>
    %79 = vector.extract_strided_slice %49 {offsets = [0, 0], sizes = [4, 1], strides = [1, 1]} : vector<4x256xf32> to vector<4x1xf32>
    %80 = tpu.concatenate %78, %79 in 1 : vector<4x255xf32>, vector<4x1xf32> -> vector<4x256xf32>
    %c0_i32_19 = arith.constant 0 : i32
    %81 = vector.broadcast %c0_i32_19 : i32 to vector<1x256xi32>
    %82 = arith.cmpi eq, %18, %81 : vector<1x256xi32>
    %83 = vector.shape_cast %82 : vector<1x256xi1> to vector<1x256xi1>
    %84 = vector.broadcast %83 : vector<1x256xi1> to vector<4x256xi1>
    %85 = arith.select %84, %80, %77 : vector<4x256xi1>, vector<4x256xf32>
    %86 = vector.extract_strided_slice %49 {offsets = [0, 1], sizes = [4, 255], strides = [1, 1]} : vector<4x256xf32> to vector<4x255xf32>
    %87 = vector.extract_strided_slice %49 {offsets = [0, 0], sizes = [4, 1], strides = [1, 1]} : vector<4x256xf32> to vector<4x1xf32>
    %88 = tpu.concatenate %86, %87 in 1 : vector<4x255xf32>, vector<4x1xf32> -> vector<4x256xf32>
    %89 = vector.extract_strided_slice %49 {offsets = [0, 255], sizes = [4, 1], strides = [1, 1]} : vector<4x256xf32> to vector<4x1xf32>
    %90 = vector.extract_strided_slice %49 {offsets = [0, 0], sizes = [4, 255], strides = [1, 1]} : vector<4x256xf32> to vector<4x255xf32>
    %91 = tpu.concatenate %89, %90 in 1 : vector<4x1xf32>, vector<4x255xf32> -> vector<4x256xf32>
    %c15_i32_20 = arith.constant 15 : i32
    %92 = vector.broadcast %c15_i32_20 : i32 to vector<1x256xi32>
    %93 = arith.cmpi eq, %18, %92 : vector<1x256xi32>
    %94 = vector.shape_cast %93 : vector<1x256xi1> to vector<1x256xi1>
    %95 = vector.broadcast %94 : vector<1x256xi1> to vector<4x256xi1>
    %96 = arith.select %95, %91, %88 : vector<4x256xi1>, vector<4x256xf32>
    %97 = vector.extract_strided_slice %49 {offsets = [0, 16], sizes = [4, 240], strides = [1, 1]} : vector<4x256xf32> to vector<4x240xf32>
    %98 = vector.extract_strided_slice %49 {offsets = [0, 224], sizes = [4, 16], strides = [1, 1]} : vector<4x256xf32> to vector<4x16xf32>
    %99 = tpu.concatenate %97, %98 in 1 : vector<4x240xf32>, vector<4x16xf32> -> vector<4x256xf32>
    %100 = vector.extract_strided_slice %99 {offsets = [0, 255], sizes = [4, 1], strides = [1, 1]} : vector<4x256xf32> to vector<4x1xf32>
    %101 = vector.extract_strided_slice %99 {offsets = [0, 0], sizes = [4, 255], strides = [1, 1]} : vector<4x256xf32> to vector<4x255xf32>
    %102 = tpu.concatenate %100, %101 in 1 : vector<4x1xf32>, vector<4x255xf32> -> vector<4x256xf32>
    %103 = vector.extract_strided_slice %99 {offsets = [0, 1], sizes = [4, 255], strides = [1, 1]} : vector<4x256xf32> to vector<4x255xf32>
    %104 = vector.extract_strided_slice %99 {offsets = [0, 0], sizes = [4, 1], strides = [1, 1]} : vector<4x256xf32> to vector<4x1xf32>
    %105 = tpu.concatenate %103, %104 in 1 : vector<4x255xf32>, vector<4x1xf32> -> vector<4x256xf32>
    %c0_i32_21 = arith.constant 0 : i32
    %106 = vector.broadcast %c0_i32_21 : i32 to vector<1x256xi32>
    %107 = arith.cmpi eq, %18, %106 : vector<1x256xi32>
    %108 = vector.shape_cast %107 : vector<1x256xi1> to vector<1x256xi1>
    %109 = vector.broadcast %108 : vector<1x256xi1> to vector<4x256xi1>
    %110 = arith.select %109, %105, %102 : vector<4x256xi1>, vector<4x256xf32>
    %111 = vector.extract_strided_slice %99 {offsets = [0, 1], sizes = [4, 255], strides = [1, 1]} : vector<4x256xf32> to vector<4x255xf32>
    %112 = vector.extract_strided_slice %99 {offsets = [0, 0], sizes = [4, 1], strides = [1, 1]} : vector<4x256xf32> to vector<4x1xf32>
    %113 = tpu.concatenate %111, %112 in 1 : vector<4x255xf32>, vector<4x1xf32> -> vector<4x256xf32>
    %114 = vector.extract_strided_slice %99 {offsets = [0, 255], sizes = [4, 1], strides = [1, 1]} : vector<4x256xf32> to vector<4x1xf32>
    %115 = vector.extract_strided_slice %99 {offsets = [0, 0], sizes = [4, 255], strides = [1, 1]} : vector<4x256xf32> to vector<4x255xf32>
    %116 = tpu.concatenate %114, %115 in 1 : vector<4x1xf32>, vector<4x255xf32> -> vector<4x256xf32>
    %c15_i32_22 = arith.constant 15 : i32
    %117 = vector.broadcast %c15_i32_22 : i32 to vector<1x256xi32>
    %118 = arith.cmpi eq, %18, %117 : vector<1x256xi32>
    %119 = vector.shape_cast %118 : vector<1x256xi1> to vector<1x256xi1>
    %120 = vector.broadcast %119 : vector<1x256xi1> to vector<4x256xi1>
    %121 = arith.select %120, %116, %113 : vector<4x256xi1>, vector<4x256xf32>
    %122 = tpu.concatenate %63, %52, %74, %85, %49, %96, %110, %99, %121 in 0 : vector<4x256xf32>, vector<4x256xf32>, vector<4x256xf32>, vector<4x256xf32>, vector<4x256xf32>, vector<4x256xf32>, vector<4x256xf32>, vector<4x256xf32>, vector<4x256xf32> -> vector<36x256xf32>
    %c0_23 = arith.constant 0 : index
    %c0_24 = arith.constant 0 : index
    %123 = vector.load %arg6[%c0_23, %c0_24] : memref<8x36xf32, #tpu.memory_space<vmem>>, vector<8x36xf32>
    %cst_25 = arith.constant dense<0.000000e+00> : vector<8x256xf32>
    %124 = tpu.matmul %123, %122, %cst_25 {dimension_numbers = #tpu.dot_dimension_numbers<[1], [0], [0], [1], [0, 0, 1, 1], [], []>, precision = #tpu.contract_precision<fp32>} : vector<8x36xf32>, vector<36x256xf32>, vector<8x256xf32> -> vector<8x256xf32>
    %c0_26 = arith.constant 0 : index
    %c0_27 = arith.constant 0 : index
    %125 = vector.load %arg7[%c0_26, %c0_27] : memref<8x1xf32, #tpu.memory_space<vmem>>, vector<8x1xf32>
    %126 = vector.broadcast %125 : vector<8x1xf32> to vector<8x256xf32>
    %127 = arith.addf %124, %126 : vector<8x256xf32>
    %c0_28 = arith.constant 0 : index
    %c0_29 = arith.constant 0 : index
    %c0_30 = arith.constant 0 : index
    %128 = vector.load %arg4[%c0_28, %c0_29, %c0_30] : memref<1x8x1xf32, #tpu.memory_space<vmem>>, vector<1x8x1xf32>
    %129 = vector.shape_cast %128 : vector<1x8x1xf32> to vector<8x1xf32>
    %c0_31 = arith.constant 0 : index
    %c0_32 = arith.constant 0 : index
    %c0_33 = arith.constant 0 : index
    %130 = vector.load %arg5[%c0_31, %c0_32, %c0_33] : memref<1x8x1xf32, #tpu.memory_space<vmem>>, vector<1x8x1xf32>
    %131 = vector.shape_cast %130 : vector<1x8x1xf32> to vector<8x1xf32>
    %cst_34 = arith.constant dense<0.000000e+00> : vector<8xf32>
    %132 = vector.multi_reduction <add>, %127, %cst_34 [1] : vector<8x256xf32> to vector<8xf32>
    %133 = vector.shape_cast %132 : vector<8xf32> to vector<8x1xf32>
    %cst_35 = arith.constant 2.560000e+02 : f32
    %134 = vector.broadcast %cst_35 : f32 to vector<8x1xf32>
    %135 = arith.divf %133, %134 : vector<8x1xf32>
    %136 = vector.broadcast %135 : vector<8x1xf32> to vector<8x256xf32>
    %137 = arith.subf %127, %136 : vector<8x256xf32>
    %138 = arith.mulf %137, %137 : vector<8x256xf32>
    %cst_36 = arith.constant dense<0.000000e+00> : vector<8xf32>
    %139 = vector.multi_reduction <add>, %138, %cst_36 [1] : vector<8x256xf32> to vector<8xf32>
    %140 = vector.shape_cast %139 : vector<8xf32> to vector<8x1xf32>
    %cst_37 = arith.constant 2.560000e+02 : f32
    %141 = vector.broadcast %cst_37 : f32 to vector<8x1xf32>
    %142 = arith.divf %140, %141 : vector<8x1xf32>
    %cst_38 = arith.constant 1.000000e+00 : f32
    %143 = vector.broadcast %cst_38 : f32 to vector<8x1xf32>
    %144 = arith.addf %143, %129 : vector<8x1xf32>
    %cst_39 = arith.constant 9.99999974E-6 : f32
    %145 = vector.broadcast %cst_39 : f32 to vector<8x1xf32>
    %146 = arith.addf %142, %145 : vector<8x1xf32>
    %147 = math.rsqrt %146 : vector<8x1xf32>
    %148 = vector.broadcast %147 : vector<8x1xf32> to vector<8x256xf32>
    %149 = arith.mulf %137, %148 : vector<8x256xf32>
    %150 = vector.broadcast %144 : vector<8x1xf32> to vector<8x256xf32>
    %151 = arith.mulf %150, %149 : vector<8x256xf32>
    %152 = vector.broadcast %131 : vector<8x1xf32> to vector<8x256xf32>
    %153 = arith.addf %151, %152 : vector<8x256xf32>
    %cst_40 = arith.constant 0.000000e+00 : f32
    %154 = vector.broadcast %cst_40 : f32 to vector<8x256xf32>
    %155 = arith.cmpf oge, %153, %154 : vector<8x256xf32>
    %cst_41 = arith.constant 2.000000e-01 : f32
    %156 = vector.broadcast %cst_41 : f32 to vector<8x256xf32>
    %157 = arith.mulf %156, %153 : vector<8x256xf32>
    %158 = arith.select %155, %153, %157 : vector<8x256xi1>, vector<8x256xf32>
    %159 = vector.extract_strided_slice %158 {offsets = [0, 16], sizes = [8, 16], strides = [1, 1]} : vector<8x256xf32> to vector<8x16xf32>
    %160 = vector.extract_strided_slice %158 {offsets = [0, 0], sizes = [8, 240], strides = [1, 1]} : vector<8x256xf32> to vector<8x240xf32>
    %161 = tpu.concatenate %159, %160 in 1 : vector<8x16xf32>, vector<8x240xf32> -> vector<8x256xf32>
    %162 = vector.extract_strided_slice %161 {offsets = [0, 255], sizes = [8, 1], strides = [1, 1]} : vector<8x256xf32> to vector<8x1xf32>
    %163 = vector.extract_strided_slice %161 {offsets = [0, 0], sizes = [8, 255], strides = [1, 1]} : vector<8x256xf32> to vector<8x255xf32>
    %164 = tpu.concatenate %162, %163 in 1 : vector<8x1xf32>, vector<8x255xf32> -> vector<8x256xf32>
    %165 = vector.extract_strided_slice %161 {offsets = [0, 1], sizes = [8, 255], strides = [1, 1]} : vector<8x256xf32> to vector<8x255xf32>
    %166 = vector.extract_strided_slice %161 {offsets = [0, 0], sizes = [8, 1], strides = [1, 1]} : vector<8x256xf32> to vector<8x1xf32>
    %167 = tpu.concatenate %165, %166 in 1 : vector<8x255xf32>, vector<8x1xf32> -> vector<8x256xf32>
    %c0_i32_42 = arith.constant 0 : i32
    %168 = vector.broadcast %c0_i32_42 : i32 to vector<1x256xi32>
    %169 = arith.cmpi eq, %18, %168 : vector<1x256xi32>
    %170 = vector.shape_cast %169 : vector<1x256xi1> to vector<1x256xi1>
    %171 = vector.broadcast %170 : vector<1x256xi1> to vector<8x256xi1>
    %172 = arith.select %171, %167, %164 : vector<8x256xi1>, vector<8x256xf32>
    %173 = vector.extract_strided_slice %161 {offsets = [0, 1], sizes = [8, 255], strides = [1, 1]} : vector<8x256xf32> to vector<8x255xf32>
    %174 = vector.extract_strided_slice %161 {offsets = [0, 0], sizes = [8, 1], strides = [1, 1]} : vector<8x256xf32> to vector<8x1xf32>
    %175 = tpu.concatenate %173, %174 in 1 : vector<8x255xf32>, vector<8x1xf32> -> vector<8x256xf32>
    %176 = vector.extract_strided_slice %161 {offsets = [0, 255], sizes = [8, 1], strides = [1, 1]} : vector<8x256xf32> to vector<8x1xf32>
    %177 = vector.extract_strided_slice %161 {offsets = [0, 0], sizes = [8, 255], strides = [1, 1]} : vector<8x256xf32> to vector<8x255xf32>
    %178 = tpu.concatenate %176, %177 in 1 : vector<8x1xf32>, vector<8x255xf32> -> vector<8x256xf32>
    %c15_i32_43 = arith.constant 15 : i32
    %179 = vector.broadcast %c15_i32_43 : i32 to vector<1x256xi32>
    %180 = arith.cmpi eq, %18, %179 : vector<1x256xi32>
    %181 = vector.shape_cast %180 : vector<1x256xi1> to vector<1x256xi1>
    %182 = vector.broadcast %181 : vector<1x256xi1> to vector<8x256xi1>
    %183 = arith.select %182, %178, %175 : vector<8x256xi1>, vector<8x256xf32>
    %184 = vector.extract_strided_slice %158 {offsets = [0, 255], sizes = [8, 1], strides = [1, 1]} : vector<8x256xf32> to vector<8x1xf32>
    %185 = vector.extract_strided_slice %158 {offsets = [0, 0], sizes = [8, 255], strides = [1, 1]} : vector<8x256xf32> to vector<8x255xf32>
    %186 = tpu.concatenate %184, %185 in 1 : vector<8x1xf32>, vector<8x255xf32> -> vector<8x256xf32>
    %187 = vector.extract_strided_slice %158 {offsets = [0, 1], sizes = [8, 255], strides = [1, 1]} : vector<8x256xf32> to vector<8x255xf32>
    %188 = vector.extract_strided_slice %158 {offsets = [0, 0], sizes = [8, 1], strides = [1, 1]} : vector<8x256xf32> to vector<8x1xf32>
    %189 = tpu.concatenate %187, %188 in 1 : vector<8x255xf32>, vector<8x1xf32> -> vector<8x256xf32>
    %c0_i32_44 = arith.constant 0 : i32
    %190 = vector.broadcast %c0_i32_44 : i32 to vector<1x256xi32>
    %191 = arith.cmpi eq, %18, %190 : vector<1x256xi32>
    %192 = vector.shape_cast %191 : vector<1x256xi1> to vector<1x256xi1>
    %193 = vector.broadcast %192 : vector<1x256xi1> to vector<8x256xi1>
    %194 = arith.select %193, %189, %186 : vector<8x256xi1>, vector<8x256xf32>
    %195 = vector.extract_strided_slice %158 {offsets = [0, 1], sizes = [8, 255], strides = [1, 1]} : vector<8x256xf32> to vector<8x255xf32>
    %196 = vector.extract_strided_slice %158 {offsets = [0, 0], sizes = [8, 1], strides = [1, 1]} : vector<8x256xf32> to vector<8x1xf32>
    %197 = tpu.concatenate %195, %196 in 1 : vector<8x255xf32>, vector<8x1xf32> -> vector<8x256xf32>
    %198 = vector.extract_strided_slice %158 {offsets = [0, 255], sizes = [8, 1], strides = [1, 1]} : vector<8x256xf32> to vector<8x1xf32>
    %199 = vector.extract_strided_slice %158 {offsets = [0, 0], sizes = [8, 255], strides = [1, 1]} : vector<8x256xf32> to vector<8x255xf32>
    %200 = tpu.concatenate %198, %199 in 1 : vector<8x1xf32>, vector<8x255xf32> -> vector<8x256xf32>
    %c15_i32_45 = arith.constant 15 : i32
    %201 = vector.broadcast %c15_i32_45 : i32 to vector<1x256xi32>
    %202 = arith.cmpi eq, %18, %201 : vector<1x256xi32>
    %203 = vector.shape_cast %202 : vector<1x256xi1> to vector<1x256xi1>
    %204 = vector.broadcast %203 : vector<1x256xi1> to vector<8x256xi1>
    %205 = arith.select %204, %200, %197 : vector<8x256xi1>, vector<8x256xf32>
    %206 = vector.extract_strided_slice %158 {offsets = [0, 16], sizes = [8, 240], strides = [1, 1]} : vector<8x256xf32> to vector<8x240xf32>
    %207 = vector.extract_strided_slice %158 {offsets = [0, 224], sizes = [8, 16], strides = [1, 1]} : vector<8x256xf32> to vector<8x16xf32>
    %208 = tpu.concatenate %206, %207 in 1 : vector<8x240xf32>, vector<8x16xf32> -> vector<8x256xf32>
    %209 = vector.extract_strided_slice %208 {offsets = [0, 255], sizes = [8, 1], strides = [1, 1]} : vector<8x256xf32> to vector<8x1xf32>
    %210 = vector.extract_strided_slice %208 {offsets = [0, 0], sizes = [8, 255], strides = [1, 1]} : vector<8x256xf32> to vector<8x255xf32>
    %211 = tpu.concatenate %209, %210 in 1 : vector<8x1xf32>, vector<8x255xf32> -> vector<8x256xf32>
    %212 = vector.extract_strided_slice %208 {offsets = [0, 1], sizes = [8, 255], strides = [1, 1]} : vector<8x256xf32> to vector<8x255xf32>
    %213 = vector.extract_strided_slice %208 {offsets = [0, 0], sizes = [8, 1], strides = [1, 1]} : vector<8x256xf32> to vector<8x1xf32>
    %214 = tpu.concatenate %212, %213 in 1 : vector<8x255xf32>, vector<8x1xf32> -> vector<8x256xf32>
    %c0_i32_46 = arith.constant 0 : i32
    %215 = vector.broadcast %c0_i32_46 : i32 to vector<1x256xi32>
    %216 = arith.cmpi eq, %18, %215 : vector<1x256xi32>
    %217 = vector.shape_cast %216 : vector<1x256xi1> to vector<1x256xi1>
    %218 = vector.broadcast %217 : vector<1x256xi1> to vector<8x256xi1>
    %219 = arith.select %218, %214, %211 : vector<8x256xi1>, vector<8x256xf32>
    %220 = vector.extract_strided_slice %208 {offsets = [0, 1], sizes = [8, 255], strides = [1, 1]} : vector<8x256xf32> to vector<8x255xf32>
    %221 = vector.extract_strided_slice %208 {offsets = [0, 0], sizes = [8, 1], strides = [1, 1]} : vector<8x256xf32> to vector<8x1xf32>
    %222 = tpu.concatenate %220, %221 in 1 : vector<8x255xf32>, vector<8x1xf32> -> vector<8x256xf32>
    %223 = vector.extract_strided_slice %208 {offsets = [0, 255], sizes = [8, 1], strides = [1, 1]} : vector<8x256xf32> to vector<8x1xf32>
    %224 = vector.extract_strided_slice %208 {offsets = [0, 0], sizes = [8, 255], strides = [1, 1]} : vector<8x256xf32> to vector<8x255xf32>
    %225 = tpu.concatenate %223, %224 in 1 : vector<8x1xf32>, vector<8x255xf32> -> vector<8x256xf32>
    %c15_i32_47 = arith.constant 15 : i32
    %226 = vector.broadcast %c15_i32_47 : i32 to vector<1x256xi32>
    %227 = arith.cmpi eq, %18, %226 : vector<1x256xi32>
    %228 = vector.shape_cast %227 : vector<1x256xi1> to vector<1x256xi1>
    %229 = vector.broadcast %228 : vector<1x256xi1> to vector<8x256xi1>
    %230 = arith.select %229, %225, %222 : vector<8x256xi1>, vector<8x256xf32>
    %231 = tpu.concatenate %172, %161, %183, %194, %158, %205, %219, %208, %230 in 0 : vector<8x256xf32>, vector<8x256xf32>, vector<8x256xf32>, vector<8x256xf32>, vector<8x256xf32>, vector<8x256xf32>, vector<8x256xf32>, vector<8x256xf32>, vector<8x256xf32> -> vector<72x256xf32>
    %c0_48 = arith.constant 0 : index
    %c0_49 = arith.constant 0 : index
    %232 = vector.load %arg8[%c0_48, %c0_49] : memref<8x72xf32, #tpu.memory_space<vmem>>, vector<8x72xf32>
    %cst_50 = arith.constant dense<0.000000e+00> : vector<8x256xf32>
    %233 = tpu.matmul %232, %231, %cst_50 {dimension_numbers = #tpu.dot_dimension_numbers<[1], [0], [0], [1], [0, 0, 1, 1], [], []>, precision = #tpu.contract_precision<fp32>} : vector<8x72xf32>, vector<72x256xf32>, vector<8x256xf32> -> vector<8x256xf32>
    %c0_51 = arith.constant 0 : index
    %c0_52 = arith.constant 0 : index
    %234 = vector.load %arg9[%c0_51, %c0_52] : memref<8x1xf32, #tpu.memory_space<vmem>>, vector<8x1xf32>
    %235 = vector.broadcast %234 : vector<8x1xf32> to vector<8x256xf32>
    %236 = arith.addf %233, %235 : vector<8x256xf32>
    %c0_53 = arith.constant 0 : index
    %c0_54 = arith.constant 0 : index
    %237 = vector.load %arg10[%c0_53, %c0_54] : memref<8x4xf32, #tpu.memory_space<vmem>>, vector<8x4xf32>
    %cst_55 = arith.constant dense<0.000000e+00> : vector<8x256xf32>
    %238 = tpu.matmul %237, %1, %cst_55 {dimension_numbers = #tpu.dot_dimension_numbers<[1], [0], [0], [1], [0, 0, 1, 1], [], []>, precision = #tpu.contract_precision<fp32>} : vector<8x4xf32>, vector<4x256xf32>, vector<8x256xf32> -> vector<8x256xf32>
    %239 = arith.addf %236, %238 : vector<8x256xf32>
    %cst_56 = arith.constant 0.707106769 : f32
    %240 = vector.broadcast %cst_56 : f32 to vector<8x256xf32>
    %241 = arith.mulf %239, %240 : vector<8x256xf32>
    %c0_57 = arith.constant 0 : index
    %c0_58 = arith.constant 0 : index
    %c0_59 = arith.constant 0 : index
    %242 = vector.load %arg11[%c0_57, %c0_58, %c0_59] : memref<1x8x256xf32, #tpu.memory_space<vmem>>, vector<1x8x256xf32>
    %243 = vector.shape_cast %242 : vector<1x8x256xf32> to vector<8x256xf32>
    %244 = vector.shape_cast %241 : vector<8x256xf32> to vector<1x8x256xf32>
    tpu.vector_store %arg11[%c0_57, %c0_58, %c0_59], %244 {strides = array<i32>} : memref<1x8x256xf32, #tpu.memory_space<vmem>>, vector<1x8x256xf32>,
    return
  }
  func.func @transform_0(%arg0: i32) -> (i32, i32, i32) {
    %c0_i32 = arith.constant 0 : i32
    %c0_i32_0 = arith.constant 0 : i32
    %c0_i32_1 = arith.constant 0 : i32
    return %arg0, %c0_i32, %c0_i32_0 : i32, i32, i32
  }
  func.func @transform_1(%arg0: i32) -> (i32, i32, i32) {
    %c0_i32 = arith.constant 0 : i32
    %c0_i32_0 = arith.constant 0 : i32
    %c0_i32_1 = arith.constant 0 : i32
    return %arg0, %c0_i32, %c0_i32_0 : i32, i32, i32
  }
  func.func @transform_2(%arg0: i32) -> (i32, i32, i32) {
    %c0_i32 = arith.constant 0 : i32
    %c0_i32_0 = arith.constant 0 : i32
    %c0_i32_1 = arith.constant 0 : i32
    return %arg0, %c0_i32, %c0_i32_0 : i32, i32, i32
  }
  func.func @transform_3(%arg0: i32) -> (i32, i32, i32) {
    %c0_i32 = arith.constant 0 : i32
    %c0_i32_0 = arith.constant 0 : i32
    %c0_i32_1 = arith.constant 0 : i32
    return %arg0, %c0_i32, %c0_i32_0 : i32, i32, i32
  }
  func.func @transform_4(%arg0: i32) -> (i32, i32, i32) {
    %c0_i32 = arith.constant 0 : i32
    %c0_i32_0 = arith.constant 0 : i32
    %c0_i32_1 = arith.constant 0 : i32
    return %arg0, %c0_i32, %c0_i32_0 : i32, i32, i32
  }
  func.func @transform_5(%arg0: i32) -> (i32, i32) {
    %c0_i32 = arith.constant 0 : i32
    %c0_i32_0 = arith.constant 0 : i32
    %c0_i32_1 = arith.constant 0 : i32
    return %c0_i32, %c0_i32_0 : i32, i32
  }
  func.func @transform_6(%arg0: i32) -> (i32, i32) {
    %c0_i32 = arith.constant 0 : i32
    %c0_i32_0 = arith.constant 0 : i32
    %c0_i32_1 = arith.constant 0 : i32
    return %c0_i32, %c0_i32_0 : i32, i32
  }
  func.func @transform_7(%arg0: i32) -> (i32, i32) {
    %c0_i32 = arith.constant 0 : i32
    %c0_i32_0 = arith.constant 0 : i32
    %c0_i32_1 = arith.constant 0 : i32
    return %c0_i32, %c0_i32_0 : i32, i32
  }
  func.func @transform_8(%arg0: i32) -> (i32, i32) {
    %c0_i32 = arith.constant 0 : i32
    %c0_i32_0 = arith.constant 0 : i32
    %c0_i32_1 = arith.constant 0 : i32
    return %c0_i32, %c0_i32_0 : i32, i32
  }
  func.func @transform_9(%arg0: i32) -> (i32, i32) {
    %c0_i32 = arith.constant 0 : i32
    %c0_i32_0 = arith.constant 0 : i32
    %c0_i32_1 = arith.constant 0 : i32
    return %c0_i32, %c0_i32_0 : i32, i32
  }
  func.func @transform_10(%arg0: i32) -> (i32, i32, i32) {
    %c0_i32 = arith.constant 0 : i32
    %c0_i32_0 = arith.constant 0 : i32
    %c0_i32_1 = arith.constant 0 : i32
    return %arg0, %c0_i32, %c0_i32_0 : i32, i32, i32
  }
}

</mosaic_0001>

<llo_original>
// kernel: tpu_custom_call.1
$region0: #{tpu_custom_call.1}
  #allocation0 [shape = 'u32[]', space=smem, size = 0x4, offset = 0x4, fixed_abs, tag = 'smem constant byte address 0x4 - core index']
  #allocation1 [shape = 'u32[144,128]{1,0:T(1,128)}', space=vmem, size = 0x12000, scoped, tag = 'internal scratch']
  %s0 = inlined_call_operand.vmem [shape: f32[2,4,256], index: 0, kind: input, shape index: {}]
  %s1 = inlined_call_operand.vmem [shape: f32[2,4,1], index: 1, kind: input, shape index: {}]
  %s2 = inlined_call_operand.vmem [shape: f32[2,4,1], index: 2, kind: input, shape index: {}]
  %s3 = inlined_call_operand.vmem [shape: f32[2,8,1], index: 3, kind: input, shape index: {}]
  %s4 = inlined_call_operand.vmem [shape: f32[2,8,1], index: 4, kind: input, shape index: {}]
  %s5 = inlined_call_operand.vmem [shape: f32[8,36], index: 5, kind: input, shape index: {}]
  %s6 = inlined_call_operand.vmem [shape: f32[8,1], index: 6, kind: input, shape index: {}]
  %s7 = inlined_call_operand.vmem [shape: f32[8,72], index: 7, kind: input, shape index: {}]
  %s8 = inlined_call_operand.vmem [shape: f32[8,1], index: 8, kind: input, shape index: {}]
  %s9 = inlined_call_operand.vmem [shape: f32[8,4], index: 9, kind: input, shape index: {}]
  %s10 = inlined_call_operand.hbm [shape: f32[2,8,256], index: 10, kind: output, shape index: {}]
  %s11 = sld [smem:[#allocation0]]
  $region73: #{tpu_custom_call.1} parent=0
    _
  %s13 = ssub.s32 1, %s11
  %s14 = scalar_select 0, %s13, %s11
  $region1: #{tpu_custom_call.1} parent=0
    #allocation2 [shape = 'u8[16384]{0}', space=vmem, size = 0x4000, scoped, tag = 'output window, operand 0']
    #allocation3 [shape = 's32[2]{0}', space=sflag, size = 0x8, scoped, tag = 'scoped memory for tpu_custom_call.1']
    %15 = vsyncpa [#allocation3], 0
    %s16 = scalar_lea.sflag [#allocation3], 1
    %17 = vsyncpa %s16, 0
    loop: start=0, step=1, limit=4
    $region2: #{tpu_custom_call.1} parent=1 // loop_pre_header
      _
    $region3: #{tpu_custom_call.1} parent=1 // loop_header
      %s19 = sphi 0, %s23
      %p20 = scmp.ge.s32.totalorder %s19, 4
      %s29 = sphi 0, %s31
      %s32 = sphi 0, %s29
      %s33 = sphi 0, %s32
      %s49 = sphi 0, %s33
      %s55 = sphi 0, %s57
      %s58 = sphi 0, %s55
      %s59 = sphi 0, %s58
      %s75 = sphi 0, %s59
      %s81 = sphi 0, %s83
      %s84 = sphi 0, %s81
      %s85 = sphi 0, %s84
      %s101 = sphi 0, %s85
      %s107 = sphi 0, %s109
      %s110 = sphi 0, %s107
      %s111 = sphi 0, %s110
      %s127 = sphi 0, %s111
      %s133 = sphi 0, %s135
      %s136 = sphi 0, %s133
      %s137 = sphi 0, %s136
      %s153 = sphi 0, %s137
      %s157 = sphi 0, %s157
      %s159 = sphi 0, %s157
      %s160 = sphi 0, %s159
      %s174 = sphi 0, %s160
      %s178 = sphi 0, %s178
      %s180 = sphi 0, %s178
      %s181 = sphi 0, %s180
      %s195 = sphi 0, %s181
      %s199 = sphi 0, %s199
      %s201 = sphi 0, %s199
      %s202 = sphi 0, %s201
      %s216 = sphi 0, %s202
      %s220 = sphi 0, %s220
      %s222 = sphi 0, %s220
      %s223 = sphi 0, %s222
      %s237 = sphi 0, %s223
      %s241 = sphi 0, %s241
      %s243 = sphi 0, %s241
      %s244 = sphi 0, %s243
      %s258 = sphi 0, %s244
      %s264 = sphi 0, %s266
      %s267 = sphi 0, %s264
      %s268 = sphi 0, %s267
      %s284 = sphi 0, %s268
    $region4: #{tpu_custom_call.1} parent=1 // loop_header_branch
      %22 = sbr.rel (%p20) target = $region8
    $region5: #{tpu_custom_call.1} parent=1 // loop_body
      %s24 = ssub.s32 %s19, 1
      %s25 = ssub.s32 %s19, 2
      %s26 = sadd.s32 %s19, 1
      %s27 = ssub.s32 %s19, %s26
      %p28 = scmp.eq.s32.totalorder %s27, 0
      %s30 = sadd.s32 %s29, 1
      %s31 = scalar_select %p28, %s29, %s30
      %p34 = pneg %p28
      %p35 = scmp.eq.s32.totalorder %s19, 1
      %p36 = por %p34, %p35
      %p37 = scmp.ne.s32.totalorder %s29, %s32
      %p38 = scmp.eq.s32.totalorder %s19, 0
      %p39 = por %p37, %p38
      %p40 = scmp.ne.s32.totalorder %s29, %s32
      %p41 = scmp.eq.s32.totalorder %s24, 1
      %p42 = por %p40, %p41
      %p43 = scmp.ne.s32.totalorder %s32, %s33
      %p44 = scmp.eq.s32.totalorder %s24, 0
      %p45 = por %p43, %p44
      %p46 = scmp.ne.s32.totalorder %s32, %s33
      %p47 = scmp.eq.s32.totalorder %s25, 1
      %p48 = por %p46, %p47
      %p50 = scmp.ne.s32.totalorder %s33, %s49
      %p51 = scmp.eq.s32.totalorder %s25, 0
      %p52 = por %p50, %p51
      %s53 = ssub.s32 %s19, %s26
      %p54 = scmp.eq.s32.totalorder %s53, 0
      %s56 = sadd.s32 %s55, 1
      %s57 = scalar_select %p54, %s55, %s56
      %p60 = pneg %p54
      %p61 = scmp.eq.s32.totalorder %s19, 1
      %p62 = por %p60, %p61
      %p63 = scmp.ne.s32.totalorder %s55, %s58
      %p64 = scmp.eq.s32.totalorder %s19, 0
      %p65 = por %p63, %p64
      %p66 = scmp.ne.s32.totalorder %s55, %s58
      %p67 = scmp.eq.s32.totalorder %s24, 1
      %p68 = por %p66, %p67
      %p69 = scmp.ne.s32.totalorder %s58, %s59
      %p70 = scmp.eq.s32.totalorder %s24, 0
      %p71 = por %p69, %p70
      %p72 = scmp.ne.s32.totalorder %s58, %s59
      %p73 = scmp.eq.s32.totalorder %s25, 1
      %p74 = por %p72, %p73
      %p76 = scmp.ne.s32.totalorder %s59, %s75
      %p77 = scmp.eq.s32.totalorder %s25, 0
      %p78 = por %p76, %p77
      %s79 = ssub.s32 %s19, %s26
      %p80 = scmp.eq.s32.totalorder %s79, 0
      %s82 = sadd.s32 %s81, 1
      %s83 = scalar_select %p80, %s81, %s82
      %p86 = pneg %p80
      %p87 = scmp.eq.s32.totalorder %s19, 1
      %p88 = por %p86, %p87
      %p89 = scmp.ne.s32.totalorder %s81, %s84
      %p90 = scmp.eq.s32.totalorder %s19, 0
      %p91 = por %p89, %p90
      %p92 = scmp.ne.s32.totalorder %s81, %s84
      %p93 = scmp.eq.s32.totalorder %s24, 1
      %p94 = por %p92, %p93
      %p95 = scmp.ne.s32.totalorder %s84, %s85
      %p96 = scmp.eq.s32.totalorder %s24, 0
      %p97 = por %p95, %p96
      %p98 = scmp.ne.s32.totalorder %s84, %s85
      %p99 = scmp.eq.s32.totalorder %s25, 1
      %p100 = por %p98, %p99
      %p102 = scmp.ne.s32.totalorder %s85, %s101
      %p103 = scmp.eq.s32.totalorder %s25, 0
      %p104 = por %p102, %p103
      %s105 = ssub.s32 %s19, %s26
      %p106 = scmp.eq.s32.totalorder %s105, 0
      %s108 = sadd.s32 %s107, 1
      %s109 = scalar_select %p106, %s107, %s108
      %p112 = pneg %p106
      %p113 = scmp.eq.s32.totalorder %s19, 1
      %p114 = por %p112, %p113
      %p115 = scmp.ne.s32.totalorder %s107, %s110
      %p116 = scmp.eq.s32.totalorder %s19, 0
      %p117 = por %p115, %p116
      %p118 = scmp.ne.s32.totalorder %s107, %s110
      %p119 = scmp.eq.s32.totalorder %s24, 1
      %p120 = por %p118, %p119
      %p121 = scmp.ne.s32.totalorder %s110, %s111
      %p122 = scmp.eq.s32.totalorder %s24, 0
      %p123 = por %p121, %p122
      %p124 = scmp.ne.s32.totalorder %s110, %s111
      %p125 = scmp.eq.s32.totalorder %s25, 1
      %p126 = por %p124, %p125
      %p128 = scmp.ne.s32.totalorder %s111, %s127
      %p129 = scmp.eq.s32.totalorder %s25, 0
      %p130 = por %p128, %p129
      %s131 = ssub.s32 %s19, %s26
      %p132 = scmp.eq.s32.totalorder %s131, 0
      %s134 = sadd.s32 %s133, 1
      %s135 = scalar_select %p132, %s133, %s134
      %p138 = pneg %p132
      %p139 = scmp.eq.s32.totalorder %s19, 1
      %p140 = por %p138, %p139
      %p141 = scmp.ne.s32.totalorder %s133, %s136
      %p142 = scmp.eq.s32.totalorder %s19, 0
      %p143 = por %p141, %p142
      %p144 = scmp.ne.s32.totalorder %s133, %s136
      %p145 = scmp.eq.s32.totalorder %s24, 1
      %p146 = por %p144, %p145
      %p147 = scmp.ne.s32.totalorder %s136, %s137
      %p148 = scmp.eq.s32.totalorder %s24, 0
      %p149 = por %p147, %p148
      %p150 = scmp.ne.s32.totalorder %s136, %s137
      %p151 = scmp.eq.s32.totalorder %s25, 1
      %p152 = por %p150, %p151
      %p154 = scmp.ne.s32.totalorder %s137, %s153
      %p155 = scmp.eq.s32.totalorder %s25, 0
      %p156 = por %p154, %p155
      %s158 = sadd.s32 %s157, 1
      %p161 = scmp.eq.s32.totalorder %s19, 1
      %p162 = scmp.ne.s32.totalorder %s157, %s159
      %p163 = scmp.eq.s32.totalorder %s19, 0
      %p164 = por %p162, %p163
      %p165 = scmp.ne.s32.totalorder %s157, %s159
      %p166 = scmp.eq.s32.totalorder %s24, 1
      %p167 = por %p165, %p166
      %p168 = scmp.ne.s32.totalorder %s159, %s160
      %p169 = scmp.eq.s32.totalorder %s24, 0
      %p170 = por %p168, %p169
      %p171 = scmp.ne.s32.totalorder %s159, %s160
      %p172 = scmp.eq.s32.totalorder %s25, 1
      %p173 = por %p171, %p172
      %p175 = scmp.ne.s32.totalorder %s160, %s174
      %p176 = scmp.eq.s32.totalorder %s25, 0
      %p177 = por %p175, %p176
      %s179 = sadd.s32 %s178, 1
      %p182 = scmp.eq.s32.totalorder %s19, 1
      %p183 = scmp.ne.s32.totalorder %s178, %s180
      %p184 = scmp.eq.s32.totalorder %s19, 0
      %p185 = por %p183, %p184
      %p186 = scmp.ne.s32.totalorder %s178, %s180
      %p187 = scmp.eq.s32.totalorder %s24, 1
      %p188 = por %p186, %p187
      %p189 = scmp.ne.s32.totalorder %s180, %s181
      %p190 = scmp.eq.s32.totalorder %s24, 0
      %p191 = por %p189, %p190
      %p192 = scmp.ne.s32.totalorder %s180, %s181
      %p193 = scmp.eq.s32.totalorder %s25, 1
      %p194 = por %p192, %p193
      %p196 = scmp.ne.s32.totalorder %s181, %s195
      %p197 = scmp.eq.s32.totalorder %s25, 0
      %p198 = por %p196, %p197
      %s200 = sadd.s32 %s199, 1
      %p203 = scmp.eq.s32.totalorder %s19, 1
      %p204 = scmp.ne.s32.totalorder %s199, %s201
      %p205 = scmp.eq.s32.totalorder %s19, 0
      %p206 = por %p204, %p205
      %p207 = scmp.ne.s32.totalorder %s199, %s201
      %p208 = scmp.eq.s32.totalorder %s24, 1
      %p209 = por %p207, %p208
      %p210 = scmp.ne.s32.totalorder %s201, %s202
      %p211 = scmp.eq.s32.totalorder %s24, 0
      %p212 = por %p210, %p211
      %p213 = scmp.ne.s32.totalorder %s201, %s202
      %p214 = scmp.eq.s32.totalorder %s25, 1
      %p215 = por %p213, %p214
      %p217 = scmp.ne.s32.totalorder %s202, %s216
      %p218 = scmp.eq.s32.totalorder %s25, 0
      %p219 = por %p217, %p218
      %s221 = sadd.s32 %s220, 1
      %p224 = scmp.eq.s32.totalorder %s19, 1
      %p225 = scmp.ne.s32.totalorder %s220, %s222
      %p226 = scmp.eq.s32.totalorder %s19, 0
      %p227 = por %p225, %p226
      %p228 = scmp.ne.s32.totalorder %s220, %s222
      %p229 = scmp.eq.s32.totalorder %s24, 1
      %p230 = por %p228, %p229
      %p231 = scmp.ne.s32.totalorder %s222, %s223
      %p232 = scmp.eq.s32.totalorder %s24, 0
      %p233 = por %p231, %p232
      %p234 = scmp.ne.s32.totalorder %s222, %s223
      %p235 = scmp.eq.s32.totalorder %s25, 1
      %p236 = por %p234, %p235
      %p238 = scmp.ne.s32.totalorder %s223, %s237
      %p239 = scmp.eq.s32.totalorder %s25, 0
      %p240 = por %p238, %p239
      %s242 = sadd.s32 %s241, 1
      %p245 = scmp.eq.s32.totalorder %s19, 1
      %p246 = scmp.ne.s32.totalorder %s241, %s243
      %p247 = scmp.eq.s32.totalorder %s19, 0
      %p248 = por %p246, %p247
      %p249 = scmp.ne.s32.totalorder %s241, %s243
      %p250 = scmp.eq.s32.totalorder %s24, 1
      %p251 = por %p249, %p250
      %p252 = scmp.ne.s32.totalorder %s243, %s244
      %p253 = scmp.eq.s32.totalorder %s24, 0
      %p254 = por %p252, %p253
      %p255 = scmp.ne.s32.totalorder %s243, %s244
      %p256 = scmp.eq.s32.totalorder %s25, 1
      %p257 = por %p255, %p256
      %p259 = scmp.ne.s32.totalorder %s244, %s258
      %p260 = scmp.eq.s32.totalorder %s25, 0
      %p261 = por %p259, %p260
      %s262 = ssub.s32 %s19, %s26
      %p263 = scmp.eq.s32.totalorder %s262, 0
      %s265 = sadd.s32 %s264, 1
      %s266 = scalar_select %p263, %s264, %s265
      %p269 = pneg %p263
      %p270 = scmp.eq.s32.totalorder %s19, 1
      %p271 = por %p269, %p270
      %p272 = scmp.ne.s32.totalorder %s264, %s267
      %p273 = scmp.eq.s32.totalorder %s19, 0
      %p274 = por %p272, %p273
      %p275 = scmp.ne.s32.totalorder %s264, %s267
      %p276 = scmp.eq.s32.totalorder %s24, 1
      %p277 = por %p275, %p276
      %p278 = scmp.ne.s32.totalorder %s267, %s268
      %p279 = scmp.eq.s32.totalorder %s24, 0
      %p280 = por %p278, %p279
      %p281 = scmp.ne.s32.totalorder %s267, %s268
      %p282 = scmp.eq.s32.totalorder %s25, 1
      %p283 = por %p281, %p282
      %p285 = scmp.ne.s32.totalorder %s268, %s284
      %p286 = scmp.eq.s32.totalorder %s25, 0
      %p287 = por %p285, %p286
      %p288 = scmp.le.s32.totalorder 1, %s19
      %p289 = scmp.lt.s32.totalorder %s19, 3
      %p290 = pnand %p288, %p289
      %p291 = pneg %p290
      // Predicated region
      $region9: #{tpu_custom_call.1} parent=5 // pred_check
        _
      $region10: #{tpu_custom_call.1} parent=5 // pred_check_branch
        %293 = sbr.rel (%p290) target = $region12
      $region11: #{tpu_custom_call.1} parent=5 // pred_region
        %s294 = ssub.s32 %s19, 1
        // Predicated region
        $region13: #{tpu_custom_call.1} parent=11 // pred_check
          %p295 = pneg %p170
        $region14: #{tpu_custom_call.1} parent=11 // pred_check_branch
          %297 = sbr.rel (%p295) target = $region16
        $region15: #{tpu_custom_call.1} parent=11 // pred_region
          _
        $region16: #{tpu_custom_call.1} parent=11 // pred_fallthru
          _
        // Predicated region
        $region17: #{tpu_custom_call.1} parent=11 // pred_check
          %p298 = pneg %p191
        $region18: #{tpu_custom_call.1} parent=11 // pred_check_branch
          %300 = sbr.rel (%p298) target = $region20
        $region19: #{tpu_custom_call.1} parent=11 // pred_region
          _
        $region20: #{tpu_custom_call.1} parent=11 // pred_fallthru
          _
        // Predicated region
        $region21: #{tpu_custom_call.1} parent=11 // pred_check
          %p301 = pneg %p212
        $region22: #{tpu_custom_call.1} parent=11 // pred_check_branch
          %303 = sbr.rel (%p301) target = $region24
        $region23: #{tpu_custom_call.1} parent=11 // pred_region
          _
        $region24: #{tpu_custom_call.1} parent=11 // pred_fallthru
          _
        // Predicated region
        $region25: #{tpu_custom_call.1} parent=11 // pred_check
          %p304 = pneg %p233
        $region26: #{tpu_custom_call.1} parent=11 // pred_check_branch
          %306 = sbr.rel (%p304) target = $region28
        $region27: #{tpu_custom_call.1} parent=11 // pred_region
          _
        $region28: #{tpu_custom_call.1} parent=11 // pred_fallthru
          _
        // Predicated region
        $region29: #{tpu_custom_call.1} parent=11 // pred_check
          %p307 = pneg %p254
        $region30: #{tpu_custom_call.1} parent=11 // pred_check_branch
          %309 = sbr.rel (%p307) target = $region32
        $region31: #{tpu_custom_call.1} parent=11 // pred_region
          _
        $region32: #{tpu_custom_call.1} parent=11 // pred_fallthru
          _
      $region12: #{tpu_custom_call.1} parent=5 // pred_fallthru
        _
      %p310 = scmp.lt.s32.totalorder %s19, 2
      // Predicated region
      $region33: #{tpu_custom_call.1} parent=5 // pred_check
        %p311 = pneg %p310
      $region34: #{tpu_custom_call.1} parent=5 // pred_check_branch
        %313 = sbr.rel (%p311) target = $region36
      $region35: #{tpu_custom_call.1} parent=5 // pred_region
        // Predicated region
        $region37: #{tpu_custom_call.1} parent=35 // pred_check
          %p314 = pneg %p39
        $region38: #{tpu_custom_call.1} parent=35 // pred_check_branch
          %316 = sbr.rel (%p314) target = $region40
        $region39: #{tpu_custom_call.1} parent=35 // pred_region
          %p317 = scmp.lt.s32.totalorder %s19, 1
          %s318 = scalar_select %p317, %s19, 1
          %s319 = smul.addr %s318, 2
          %s320 = smul.addr %s319, 4
          %s321 = scalar_lea.vmem %s0, %s320
        $region40: #{tpu_custom_call.1} parent=35 // pred_fallthru
          _
        // Predicated region
        $region41: #{tpu_custom_call.1} parent=35 // pred_check
          %p322 = pneg %p65
        $region42: #{tpu_custom_call.1} parent=35 // pred_check_branch
          %324 = sbr.rel (%p322) target = $region44
        $region43: #{tpu_custom_call.1} parent=35 // pred_region
          %p325 = scmp.lt.s32.totalorder %s19, 1
          %s326 = scalar_select %p325, %s19, 1
          %s327 = smul.addr %s326, 4
          %s328 = scalar_lea.vmem %s1, %s327
        $region44: #{tpu_custom_call.1} parent=35 // pred_fallthru
          _
        // Predicated region
        $region45: #{tpu_custom_call.1} parent=35 // pred_check
          %p329 = pneg %p91
        $region46: #{tpu_custom_call.1} parent=35 // pred_check_branch
          %331 = sbr.rel (%p329) target = $region48
        $region47: #{tpu_custom_call.1} parent=35 // pred_region
          %p332 = scmp.lt.s32.totalorder %s19, 1
          %s333 = scalar_select %p332, %s19, 1
          %s334 = smul.addr %s333, 4
          %s335 = scalar_lea.vmem %s2, %s334
        $region48: #{tpu_custom_call.1} parent=35 // pred_fallthru
          _
        // Predicated region
        $region49: #{tpu_custom_call.1} parent=35 // pred_check
          %p336 = pneg %p117
        $region50: #{tpu_custom_call.1} parent=35 // pred_check_branch
          %338 = sbr.rel (%p336) target = $region52
        $region51: #{tpu_custom_call.1} parent=35 // pred_region
          %p339 = scmp.lt.s32.totalorder %s19, 1
          %s340 = scalar_select %p339, %s19, 1
          %s341 = smul.addr %s340, 8
          %s342 = scalar_lea.vmem %s3, %s341
        $region52: #{tpu_custom_call.1} parent=35 // pred_fallthru
          _
        // Predicated region
        $region53: #{tpu_custom_call.1} parent=35 // pred_check
          %p343 = pneg %p143
        $region54: #{tpu_custom_call.1} parent=35 // pred_check_branch
          %345 = sbr.rel (%p343) target = $region56
        $region55: #{tpu_custom_call.1} parent=35 // pred_region
          %p346 = scmp.lt.s32.totalorder %s19, 1
          %s347 = scalar_select %p346, %s19, 1
          %s348 = smul.addr %s347, 8
          %s349 = scalar_lea.vmem %s4, %s348
        $region56: #{tpu_custom_call.1} parent=35 // pred_fallthru
          _
      $region36: #{tpu_custom_call.1} parent=5 // pred_fallthru
        _
      %p350 = scmp.le.s32.totalorder 1, %s19
      %p351 = scmp.lt.s32.totalorder %s19, 3
      %p352 = pnand %p350, %p351
      %p353 = pneg %p352
      // Predicated region
      $region57: #{tpu_custom_call.1} parent=5 // pred_check
        _
      $region58: #{tpu_custom_call.1} parent=5 // pred_check_branch
        %355 = sbr.rel (%p352) target = $region60
      $region59: #{tpu_custom_call.1} parent=5 // pred_region
        %s356 = ssub.s32 %s19, 1
        %p357 = scmp.lt.s32.totalorder %s24, 1
        %s358 = scalar_select %p357, %s24, 1
        %s359 = smul.addr %s358, 2
        %s360 = smul.addr %s359, 4
        %s361 = scalar_lea.vmem %s0, %s360
        %p362 = pneg %p45
        %p363 = pneg %p42
        %p364 = scmp.lt.s32.totalorder %s24, 1
        %s365 = scalar_select %p364, %s24, 1
        %s366 = smul.addr %s365, 4
        %s367 = scalar_lea.vmem %s1, %s366
        %p368 = pneg %p71
        %p369 = pneg %p68
        %p370 = scmp.lt.s32.totalorder %s24, 1
        %s371 = scalar_select %p370, %s24, 1
        %s372 = smul.addr %s371, 4
        %s373 = scalar_lea.vmem %s2, %s372
        %p374 = pneg %p97
        %p375 = pneg %p94
        %p376 = scmp.lt.s32.totalorder %s24, 1
        %s377 = scalar_select %p376, %s24, 1
        %s378 = smul.addr %s377, 8
        %s379 = scalar_lea.vmem %s3, %s378
        %p380 = pneg %p123
        %p381 = pneg %p120
        %p382 = scmp.lt.s32.totalorder %s24, 1
        %s383 = scalar_select %p382, %s24, 1
        %s384 = smul.addr %s383, 8
        %s385 = scalar_lea.vmem %s4, %s384
        %p386 = pneg %p149
        %p387 = pneg %p146
        %p388 = pneg %p170
        %p389 = pneg %p167
        %p390 = pneg %p191
        %p391 = pneg %p188
        %p392 = pneg %p212
        %p393 = pneg %p209
        %p394 = pneg %p233
        %p395 = pneg %p230
        %p396 = pneg %p254
        %p397 = pneg %p251
        %p398 = pneg %p280
        %p399 = pneg %p277
        %s400 = sand.u32 %s267, 1
        %s401 = scalar_lea.sflag [#allocation3], %s400
        %s402 = sand.u32 %s267, 1
        %s403 = smul.addr %s402, 16
        %s404 = scalar_lea.vmem [#allocation2], %s403
        %p405 = scmp.lt.s32.totalorder %s24, 1
        %s406 = scalar_select %p405, %s24, 1
        %s407 = smul.addr %s406, 2
        %s408 = smul.addr %s407, 4
        %s409 = scalar_lea.vmem %s0, %s408
        %p410 = scmp.lt.s32.totalorder %s24, 1
        %s411 = scalar_select %p410, %s24, 1
        %s412 = smul.addr %s411, 4
        %s413 = scalar_lea.vmem %s1, %s412
        %p414 = scmp.lt.s32.totalorder %s24, 1
        %s415 = scalar_select %p414, %s24, 1
        %s416 = smul.addr %s415, 4
        %s417 = scalar_lea.vmem %s2, %s416
        %p418 = scmp.lt.s32.totalorder %s24, 1
        %s419 = scalar_select %p418, %s24, 1
        %s420 = smul.addr %s419, 8
        %s421 = scalar_lea.vmem %s3, %s420
        %p422 = scmp.lt.s32.totalorder %s24, 1
        %s423 = scalar_select %p422, %s24, 1
        %s424 = smul.addr %s423, 8
        %s425 = scalar_lea.vmem %s4, %s424
        %v426 = vld [vmem:[%s409] sm:$0xff]
        %v427 = vlaneseq
        %v428 = vand.u32 %v427, 127
        %v429 = vadd.s32 %v428, 128
        %vm430 = vcmp.lt.s32.totalorder %v428, 0
        %v431 = vsub.s32 0, %v428
        %v432 = vsel %vm430, %v431, %v428
        %v433 = vshrl.u32 %v432, 4
        %v434 = vand.u32 %v432, 15
        %v435 = vsub.s32 0, %v434
        %v436 = vsel %vm430, %v435, %v434
        %vm437 = vcmp.lt.s32.totalorder %v429, 0
        %v438 = vsub.s32 0, %v429
        %v439 = vsel %vm437, %v438, %v429
        %v440 = vshrl.u32 %v439, 4
        %v441 = vand.u32 %v439, 15
        %v442 = vsub.s32 0, %v441
        %v443 = vsel %vm437, %v442, %v441
        %vm444 = vcmp.ne.s32.totalorder %v436, 0
        %vm445 = vcmp.ne.s32.totalorder %v443, 0
        %vm446 = vcmp.lt.s32.totalorder %v436, 0
        %vm447 = vcmp.lt.s32.totalorder %v443, 0
        %vm448 = vmand %vm446, %vm444
        %vm449 = vmand %vm447, %vm445
        %v450 = vadd.s32 %v436, 16
        %v451 = vadd.s32 %v443, 16
        %v452 = vsel %vm448, %v450, %v436
        %v453 = vsel %vm449, %v451, %v443
        %v454 = vld [vmem:[%s413] sm:$0xf]
        %v455 = vld [vmem:[%s417] sm:$0xf]
        %v457 = vcombine.high %v426, %v426
        %vm459 = vcmask 1043456
        %v460 = vsel %vm459, %v426, 0.0
        %v461 = vsel %vm459, %v457, 0.0
        %v462 = vadd.f32 %v460, %v461
        %463 = vadd.xlane.f32.xlu0 %v462
        %v464 = vpop.xlane.xlu0 %463
        %v465 = vrcp.pop 256.0
        %v466 = vmul.f32 %v464, %v465
        %v469 = vunpack.c.l.s4 839922192
        %v470 = vunpack.c.0.s8 %v469
        %v471 = vlaneseq
        %v472 = vshrl.u32 %v471, 7
        %v473 = vsub.s32 %v470, %v472
        %v474 = vrot.slane %v466, %v473
        %v476 = vsub.f32 %v426, %v474
        %v477 = vmul.f32 %v476, %v476
        %v479 = vcombine.high %v477, %v477
        %v481 = vsel %vm459, %v477, 0.0
        %v482 = vsel %vm459, %v479, 0.0
        %v483 = vadd.f32 %v481, %v482
        %484 = vadd.xlane.f32.xlu0 %v483
        %v485 = vpop.xlane.xlu0 %484
        %v486 = vmul.f32 %v485, %v465
        %v487 = vadd.f32 %v454, 1.0
        %v488 = vadd.f32 %v486, 1e-05
        %v489 = vrsqrt.pop %v488
        %v492 = vunpack.c.l.s4 839922192
        %v493 = vunpack.c.0.s8 %v492
        %v494 = vlaneseq
        %v495 = vshrl.u32 %v494, 7
        %v496 = vsub.s32 %v493, %v495
        %v497 = vrot.slane %v489, %v496
        %v499 = vmul.f32 %v476, %v497
        %501 = vset.pattern.permute.xlu0 0
        %502 = vperm.xlu0 %501, %v487
        %v503 = vpop.permute.xlu0 %502
        %v506 = vcombine.high %v499, %v499
        %v508 = vmul.f32 %v503, %v499
        %v509 = vmul.f32 %v503, %v506
        %511 = vset.pattern.permute.xlu0 0
        %512 = vperm.xlu0 %511, %v455
        %v513 = vpop.permute.xlu0 %512
        %v515 = vadd.f32 %v508, %v513
        %v516 = vadd.f32 %v509, %v513
        %vm517 = vcmp.ge.f32.partialorder %v515, 0.0
        %vm518 = vcmp.ge.f32.partialorder %v516, 0.0
        %v519 = vmul.f32 %v515, 0.2
        %v520 = vmul.f32 %v516, 0.2
        %v521 = vsel %vm517, %v515, %v519
        %v522 = vsel %vm518, %v516, %v520
        %524 = vrot.lane.b32.xlu0 %v521, 112
        %v525 = vpop.permute.xlu0 %524
        %528 = vrot.lane.b32.xlu0 %v521, 16
        %v529 = vpop.permute.xlu0 %528
        %530 = vrot.lane.b32.xlu0 %v522, 16
        %v531 = vpop.permute.xlu0 %530
        %vm532 = vcmask 130048
        %v533 = vsel %vm532, %v529, %v531
        %v535 = vsel %vm532, %v525, %v529
        %536 = vrot.lane.b32.xlu0 %v533, 1
        %v537 = vpop.permute.xlu0 %536
        %540 = vrot.lane.b32.xlu0 %v535, 1
        %v541 = vpop.permute.xlu0 %540
        %vm542 = vcmask 7168
        %v543 = vsel %vm542, %v541, %v537
        %v546 = vsel %vm542, %v537, %v541
        %547 = vrot.lane.b32.xlu0 %v535, 127
        %v548 = vpop.permute.xlu0 %547
        %549 = vrot.lane.b32.xlu0 %v533, 127
        %v550 = vpop.permute.xlu0 %549
        %vm551 = vcmask 1039360
        %v552 = vsel %vm551, %v548, %v550
        %v556 = vsel %vm551, %v550, %v548
        %vm557 = vcmp.eq.s32.totalorder %v452, 0
        %vm558 = vcmp.eq.s32.totalorder %v453, 0
        %v559 = vsel %vm557, 1, 0
        %v560 = vsel %vm558, 1, 0
        %vm561 = vcmp.eq.s32.totalorder %v559, 1
        %vm562 = vcmp.eq.s32.totalorder %v560, 1
        %v563 = vsel %vm561, %v552, %v546
        %v564 = vsel %vm562, %v556, %v543
        %vm565 = vcmp.eq.s32.totalorder %v452, 15
        %vm566 = vcmp.eq.s32.totalorder %v453, 15
        %v567 = vsel %vm565, 1, 0
        %v568 = vsel %vm566, 1, 0
        %vm569 = vcmp.eq.s32.totalorder %v567, 1
        %vm570 = vcmp.eq.s32.totalorder %v568, 1
        %v571 = vsel %vm569, %v546, %v552
        %v572 = vsel %vm570, %v543, %v556
        %573 = vrot.lane.b32.xlu0 %v522, 1
        %v574 = vpop.permute.xlu0 %573
        %576 = vrot.lane.b32.xlu0 %v521, 1
        %v577 = vpop.permute.xlu0 %576
        %v578 = vsel %vm542, %v577, %v574
        %v581 = vsel %vm542, %v574, %v577
        %582 = vrot.lane.b32.xlu0 %v521, 127
        %v583 = vpop.permute.xlu0 %582
        %584 = vrot.lane.b32.xlu0 %v522, 127
        %v585 = vpop.permute.xlu0 %584
        %v586 = vsel %vm551, %v583, %v585
        %v590 = vsel %vm551, %v585, %v583
        %v591 = vsel %vm561, %v586, %v581
        %v592 = vsel %vm562, %v590, %v578
        %v593 = vsel %vm569, %v581, %v586
        %v594 = vsel %vm570, %v578, %v590
        %595 = vrot.lane.b32.xlu0 %v522, 112
        %v596 = vpop.permute.xlu0 %595
        %vm597 = vcmask 916480
        %v598 = vsel %vm597, %v525, %v596
        %v601 = vsel %vm597, %v596, %v531
        %603 = vrot.lane.b32.xlu0 %v601, 1
        %v604 = vpop.permute.xlu0 %603
        %606 = vrot.lane.b32.xlu0 %v598, 1
        %v607 = vpop.permute.xlu0 %606
        %v608 = vsel %vm542, %v607, %v604
        %v611 = vsel %vm542, %v604, %v607
        %612 = vrot.lane.b32.xlu0 %v598, 127
        %v613 = vpop.permute.xlu0 %612
        %614 = vrot.lane.b32.xlu0 %v601, 127
        %v615 = vpop.permute.xlu0 %614
        %v616 = vsel %vm551, %v613, %v615
        %v620 = vsel %vm551, %v615, %v613
        %v621 = vsel %vm561, %v616, %v611
        %v622 = vsel %vm562, %v620, %v608
        %v623 = vsel %vm569, %v611, %v616
        %v624 = vsel %vm570, %v608, %v620
        %v625 = vrot.slane %v535, 4
        %v626 = vrot.slane %v533, 4
        %v631 = vrot.slane %v591, 4
        %v632 = vrot.slane %v592, 4
        %v637 = vrot.slane %v593, 4
        %v638 = vrot.slane %v594, 4
        %v641 = vrot.slane %v598, 4
        %v642 = vrot.slane %v601, 4
        %v645 = vsel %vm459, %v563, %v625
        %v646 = vsel %vm459, %v564, %v626
        %v647 = vsel %vm459, %v571, %v631
        %v648 = vsel %vm459, %v572, %v632
        %v649 = vsel %vm459, %v521, %v637
        %v650 = vsel %vm459, %v522, %v638
        %v651 = vsel %vm459, %v621, %v641
        %v652 = vsel %vm459, %v622, %v642
        %v653 = vld [vmem:[%s5] sm:$0xff]
        %v654 = vld [vmem:[%s6] sm:$0xff]
        %656 = vset.pattern.permute.xlu0 0
        %657 = vperm.xlu0 %656, %v654
        %v658 = vpop.permute.xlu0 %657
        %vm660 = vcmask 293888
        %v662 = vsel %vm660, %v653, 0
        %v665 = vsel %vm459, %v623, 0
        %v668 = vsel %vm459, %v624, 0
        %v670 = vand.u32 %v646, 4294901760
        %671 = vmatprep.subr.mxu0 %v670
        %v672 = vand.u32 %v645, 4294901760
        %673 = vmatpush1.msra.mxu0 %v672
        %v674 = vand.u32 %v648, 4294901760
        %675 = vmatprep.subr.mxu0 %v674
        %v676 = vand.u32 %v647, 4294901760
        %677 = vmatpush1.msra.mxu0 %v676
        %v678 = vand.u32 %v650, 4294901760
        %679 = vmatprep.subr.mxu0 %v678
        %v680 = vand.u32 %v649, 4294901760
        %681 = vmatpush1.msra.mxu0 %v680
        %v682 = vand.u32 %v652, 4294901760
        %683 = vmatprep.subr.mxu0 %v682
        %v684 = vand.u32 %v651, 4294901760
        %685 = vmatpush1.msra.mxu0 %v684
        %v686 = vand.u32 %v668, 4294901760
        %687 = vmatprep.subr.mxu0 %v686
        %v688 = vand.u32 %v665, 4294901760
        %689 = vmatpush1.msra.mxu0 %v688
        %690 = vmatprep.subr.mxu0 0.0
        %691 = vmatpush1.msra.mxu0 0.0
        %692 = vmatprep.subr.mxu0 0.0
        %693 = vmatpush1.msra.mxu0 0.0
        %694 = vmatprep.subr.mxu0 0.0
        %695 = vmatpush1.msra.mxu0 0.0
        %696 = vmatprep.subr.mxu0 0.0
        %697 = vmatpush1.msra.mxu0 0.0
        %698 = vmatprep.subr.mxu0 0.0
        %699 = vmatpush1.msra.mxu0 0.0
        %700 = vmatprep.subr.mxu0 0.0
        %701 = vmatpush1.msra.mxu0 0.0
        %702 = vmatprep.subr.mxu0 0.0
        %703 = vmatpush1.msra.mxu0 0.0
        %704 = vmatprep.subr.mxu0 0.0
        %705 = vmatpush1.msra.mxu0 0.0
        %706 = vmatprep.subr.mxu0 0.0
        %707 = vmatpush1.msra.mxu0 0.0
        %708 = vmatprep.subr.mxu0 0.0
        %709 = vmatpush1.msra.mxu0 0.0
        %710 = vmatprep.subr.mxu0 0.0
        %711 = vmatpush1.msra.mxu0 0.0
        %712 = vmatprep.subr.mxu0 0.0
        %713 = vmatpush1.msra.mxu0 0.0
        %714 = vmatprep.subr.mxu0 0.0
        %715 = vmatpush1.msra.mxu0 0.0
        %716 = vmatprep.subr.mxu0 0.0
        %717 = vmatpush1.msra.mxu0 0.0
        %718 = vmatprep.subr.mxu0 0.0
        %719 = vmatpush1.msra.mxu0 0.0
        %720 = vmatprep.subr.mxu0 0.0
        %721 = vmatpush1.msra.mxu0 0.0
        %722 = vmatprep.subr.mxu0 0.0
        %723 = vmatpush1.msra.mxu0 0.0
        %724 = vmatprep.subr.mxu0 0.0
        %725 = vmatpush1.msra.mxu0 0.0
        %726 = vmatprep.subr.mxu0 0.0
        %727 = vmatpush1.msra.mxu0 0.0
        %728 = vmatprep.subr.mxu0 0.0
        %729 = vmatpush1.msra.mxu0 0.0
        %730 = vmatprep.subr.mxu0 0.0
        %731 = vmatpush1.msra.mxu0 0.0
        %732 = vmatprep.subr.mxu0 0.0
        %733 = vmatpush1.msra.mxu0 0.0
        %734 = vmatprep.subr.mxu0 0.0
        %735 = vmatpush1.msra.mxu0 0.0
        %736 = vmatprep.subr.mxu0 0.0
        %737 = vmatpush1.msra.mxu0 0.0
        %738 = vmatprep.subr.mxu0 0.0
        %739 = vmatpush1.msra.mxu0 0.0
        %740 = vmatprep.subr.mxu0 0.0
        %741 = vmatpush1.msra.mxu0 0.0
        %742 = vmatprep.subr.mxu0 0.0
        %743 = vmatpush1.msra.mxu0 0.0
        %744 = vmatprep.mubr.f32.mxu0 0.0
        %v745 = vand.u32 %v662, 4294901760
        %v746 = vsub.f32 %v662, %v745
        %v747 = vand.u32 %v746, 4294901760
        %v748 = vsub.f32 %v746, %v747
        %v749 = vand.u32 %v748, 4294901760
        %750 = vmatmul.mubr.f32.gmra.mrb[0].mxu0 %v749
        %v751 = vpop.f32.mrb[0].mxu0
        %v752 = vadd.f32 %v658, %v751
        %v753 = vpop.f32.mrb[0].mxu0
        %v754 = vadd.f32 %v658, %v753
        %755 = vdwg.mxu0
        %v756 = vand.u32 %v646, 4294901760
        %v757 = vsub.f32 %v646, %v756
        %v758 = vand.u32 %v757, 4294901760
        %v759 = vsub.f32 %v757, %v758
        %v760 = vand.u32 %v759, 4294901760
        %761 = vmatprep.subr.mxu0 %v760
        %v762 = vand.u32 %v645, 4294901760
        %v763 = vsub.f32 %v645, %v762
        %v764 = vand.u32 %v763, 4294901760
        %v765 = vsub.f32 %v763, %v764
        %v766 = vand.u32 %v765, 4294901760
        %767 = vmatpush1.msra.mxu0 %v766
        %v768 = vand.u32 %v648, 4294901760
        %v769 = vsub.f32 %v648, %v768
        %v770 = vand.u32 %v769, 4294901760
        %v771 = vsub.f32 %v769, %v770
        %v772 = vand.u32 %v771, 4294901760
        %773 = vmatprep.subr.mxu0 %v772
        %v774 = vand.u32 %v647, 4294901760
        %v775 = vsub.f32 %v647, %v774
        %v776 = vand.u32 %v775, 4294901760
        %v777 = vsub.f32 %v775, %v776
        %v778 = vand.u32 %v777, 4294901760
        %779 = vmatpush1.msra.mxu0 %v778
        %v780 = vand.u32 %v650, 4294901760
        %v781 = vsub.f32 %v650, %v780
        %v782 = vand.u32 %v781, 4294901760
        %v783 = vsub.f32 %v781, %v782
        %v784 = vand.u32 %v783, 4294901760
        %785 = vmatprep.subr.mxu0 %v784
        %v786 = vand.u32 %v649, 4294901760
        %v787 = vsub.f32 %v649, %v786
        %v788 = vand.u32 %v787, 4294901760
        %v789 = vsub.f32 %v787, %v788
        %v790 = vand.u32 %v789, 4294901760
        %791 = vmatpush1.msra.mxu0 %v790
        %v792 = vand.u32 %v652, 4294901760
        %v793 = vsub.f32 %v652, %v792
        %v794 = vand.u32 %v793, 4294901760
        %v795 = vsub.f32 %v793, %v794
        %v796 = vand.u32 %v795, 4294901760
        %797 = vmatprep.subr.mxu0 %v796
        %v798 = vand.u32 %v651, 4294901760
        %v799 = vsub.f32 %v651, %v798
        %v800 = vand.u32 %v799, 4294901760
        %v801 = vsub.f32 %v799, %v800
        %v802 = vand.u32 %v801, 4294901760
        %803 = vmatpush1.msra.mxu0 %v802
        %v804 = vand.u32 %v668, 4294901760
        %v805 = vsub.f32 %v668, %v804
        %v806 = vand.u32 %v805, 4294901760
        %v807 = vsub.f32 %v805, %v806
        %v808 = vand.u32 %v807, 4294901760
        %809 = vmatprep.subr.mxu0 %v808
        %v810 = vand.u32 %v665, 4294901760
        %v811 = vsub.f32 %v665, %v810
        %v812 = vand.u32 %v811, 4294901760
        %v813 = vsub.f32 %v811, %v812
        %v814 = vand.u32 %v813, 4294901760
        %815 = vmatpush1.msra.mxu0 %v814
        %816 = vmatprep.subr.mxu0 0.0
        %817 = vmatpush1.msra.mxu0 0.0
        %818 = vmatprep.subr.mxu0 0.0
        %819 = vmatpush1.msra.mxu0 0.0
        %820 = vmatprep.subr.mxu0 0.0
        %821 = vmatpush1.msra.mxu0 0.0
        %822 = vmatprep.subr.mxu0 0.0
        %823 = vmatpush1.msra.mxu0 0.0
        %824 = vmatprep.subr.mxu0 0.0
        %825 = vmatpush1.msra.mxu0 0.0
        %826 = vmatprep.subr.mxu0 0.0
        %827 = vmatpush1.msra.mxu0 0.0
        %828 = vmatprep.subr.mxu0 0.0
        %829 = vmatpush1.msra.mxu0 0.0
        %830 = vmatprep.subr.mxu0 0.0
        %831 = vmatpush1.msra.mxu0 0.0
        %832 = vmatprep.subr.mxu0 0.0
        %833 = vmatpush1.msra.mxu0 0.0
        %834 = vmatprep.subr.mxu0 0.0
        %835 = vmatpush1.msra.mxu0 0.0
        %836 = vmatprep.subr.mxu0 0.0
        %837 = vmatpush1.msra.mxu0 0.0
        %838 = vmatprep.subr.mxu0 0.0
        %839 = vmatpush1.msra.mxu0 0.0
        %840 = vmatprep.subr.mxu0 0.0
        %841 = vmatpush1.msra.mxu0 0.0
        %842 = vmatprep.subr.mxu0 0.0
        %843 = vmatpush1.msra.mxu0 0.0
        %844 = vmatprep.subr.mxu0 0.0
        %845 = vmatpush1.msra.mxu0 0.0
        %846 = vmatprep.subr.mxu0 0.0
        %847 = vmatpush1.msra.mxu0 0.0
        %848 = vmatprep.subr.mxu0 0.0
        %849 = vmatpush1.msra.mxu0 0.0
        %850 = vmatprep.subr.mxu0 0.0
        %851 = vmatpush1.msra.mxu0 0.0
        %852 = vmatprep.subr.mxu0 0.0
        %853 = vmatpush1.msra.mxu0 0.0
        %854 = vmatprep.subr.mxu0 0.0
        %855 = vmatpush1.msra.mxu0 0.0
        %856 = vmatprep.subr.mxu0 0.0
        %857 = vmatpush1.msra.mxu0 0.0
        %858 = vmatprep.subr.mxu0 0.0
        %859 = vmatpush1.msra.mxu0 0.0
        %860 = vmatprep.subr.mxu0 0.0
        %861 = vmatpush1.msra.mxu0 0.0
        %862 = vmatprep.subr.mxu0 0.0
        %863 = vmatpush1.msra.mxu0 0.0
        %864 = vmatprep.subr.mxu0 0.0
        %865 = vmatpush1.msra.mxu0 0.0
        %866 = vmatprep.subr.mxu0 0.0
        %867 = vmatpush1.msra.mxu0 0.0
        %868 = vmatprep.subr.mxu0 0.0
        %869 = vmatpush1.msra.mxu0 0.0
        %870 = vmatprep.mubr.f32.mxu0 0.0
        %v871 = vand.u32 %v662, 4294901760
        %872 = vmatmul.mubr.f32.gmra.mrb[0].mxu0 %v871
        %v873 = vpop.f32.mrb[0].mxu0
        %v874 = vadd.f32 %v752, %v873
        %v875 = vpop.f32.mrb[0].mxu0
        %v876 = vadd.f32 %v754, %v875
        %877 = vdwg.mxu0
        %v878 = vand.u32 %v646, 4294901760
        %v879 = vsub.f32 %v646, %v878
        %880 = vmatprep.subr.mxu0 %v879
        %v881 = vand.u32 %v645, 4294901760
        %v882 = vsub.f32 %v645, %v881
        %883 = vmatpush1.msra.mxu0 %v882
        %v884 = vand.u32 %v648, 4294901760
        %v885 = vsub.f32 %v648, %v884
        %886 = vmatprep.subr.mxu0 %v885
        %v887 = vand.u32 %v647, 4294901760
        %v888 = vsub.f32 %v647, %v887
        %889 = vmatpush1.msra.mxu0 %v888
        %v890 = vand.u32 %v650, 4294901760
        %v891 = vsub.f32 %v650, %v890
        %892 = vmatprep.subr.mxu0 %v891
        %v893 = vand.u32 %v649, 4294901760
        %v894 = vsub.f32 %v649, %v893
        %895 = vmatpush1.msra.mxu0 %v894
        %v896 = vand.u32 %v652, 4294901760
        %v897 = vsub.f32 %v652, %v896
        %898 = vmatprep.subr.mxu0 %v897
        %v899 = vand.u32 %v651, 4294901760
        %v900 = vsub.f32 %v651, %v899
        %901 = vmatpush1.msra.mxu0 %v900
        %v902 = vand.u32 %v668, 4294901760
        %v903 = vsub.f32 %v668, %v902
        %904 = vmatprep.subr.mxu0 %v903
        %v905 = vand.u32 %v665, 4294901760
        %v906 = vsub.f32 %v665, %v905
        %907 = vmatpush1.msra.mxu0 %v906
        %908 = vmatprep.subr.mxu0 0.0
        %909 = vmatpush1.msra.mxu0 0.0
        %910 = vmatprep.subr.mxu0 0.0
        %911 = vmatpush1.msra.mxu0 0.0
        %912 = vmatprep.subr.mxu0 0.0
        %913 = vmatpush1.msra.mxu0 0.0
        %914 = vmatprep.subr.mxu0 0.0
        %915 = vmatpush1.msra.mxu0 0.0
        %916 = vmatprep.subr.mxu0 0.0
        %917 = vmatpush1.msra.mxu0 0.0
        %918 = vmatprep.subr.mxu0 0.0
        %919 = vmatpush1.msra.mxu0 0.0
        %920 = vmatprep.subr.mxu0 0.0
        %921 = vmatpush1.msra.mxu0 0.0
        %922 = vmatprep.subr.mxu0 0.0
        %923 = vmatpush1.msra.mxu0 0.0
        %924 = vmatprep.subr.mxu0 0.0
        %925 = vmatpush1.msra.mxu0 0.0
        %926 = vmatprep.subr.mxu0 0.0
        %927 = vmatpush1.msra.mxu0 0.0
        %928 = vmatprep.subr.mxu0 0.0
        %929 = vmatpush1.msra.mxu0 0.0
        %930 = vmatprep.subr.mxu0 0.0
        %931 = vmatpush1.msra.mxu0 0.0
        %932 = vmatprep.subr.mxu0 0.0
        %933 = vmatpush1.msra.mxu0 0.0
        %934 = vmatprep.subr.mxu0 0.0
        %935 = vmatpush1.msra.mxu0 0.0
        %936 = vmatprep.subr.mxu0 0.0
        %937 = vmatpush1.msra.mxu0 0.0
        %938 = vmatprep.subr.mxu0 0.0
        %939 = vmatpush1.msra.mxu0 0.0
        %940 = vmatprep.subr.mxu0 0.0
        %941 = vmatpush1.msra.mxu0 0.0
        %942 = vmatprep.subr.mxu0 0.0
        %943 = vmatpush1.msra.mxu0 0.0
        %944 = vmatprep.subr.mxu0 0.0
        %945 = vmatpush1.msra.mxu0 0.0
        %946 = vmatprep.subr.mxu0 0.0
        %947 = vmatpush1.msra.mxu0 0.0
        %948 = vmatprep.subr.mxu0 0.0
        %949 = vmatpush1.msra.mxu0 0.0
        %950 = vmatprep.subr.mxu0 0.0
        %951 = vmatpush1.msra.mxu0 0.0
        %952 = vmatprep.subr.mxu0 0.0
        %953 = vmatpush1.msra.mxu0 0.0
        %954 = vmatprep.subr.mxu0 0.0
        %955 = vmatpush1.msra.mxu0 0.0
        %956 = vmatprep.subr.mxu0 0.0
        %957 = vmatpush1.msra.mxu0 0.0
        %958 = vmatprep.subr.mxu0 0.0
        %959 = vmatpush1.msra.mxu0 0.0
        %960 = vmatprep.subr.mxu0 0.0
        %961 = vmatpush1.msra.mxu0 0.0
        %962 = vmatprep.mubr.f32.mxu0 0.0
        %v963 = vand.u32 %v662, 4294901760
        %v964 = vsub.f32 %v662, %v963
        %965 = vmatmul.mubr.f32.gmra.mrb[0].mxu0 %v964
        %v966 = vpop.f32.mrb[0].mxu0
        %v967 = vadd.f32 %v874, %v966
        %v968 = vpop.f32.mrb[0].mxu0
        %v969 = vadd.f32 %v876, %v968
        %970 = vdwg.mxu0
        %v971 = vand.u32 %v646, 4294901760
        %972 = vmatprep.subr.mxu0 %v971
        %v973 = vand.u32 %v645, 4294901760
        %974 = vmatpush1.msra.mxu0 %v973
        %v975 = vand.u32 %v648, 4294901760
        %976 = vmatprep.subr.mxu0 %v975
        %v977 = vand.u32 %v647, 4294901760
        %978 = vmatpush1.msra.mxu0 %v977
        %v979 = vand.u32 %v650, 4294901760
        %980 = vmatprep.subr.mxu0 %v979
        %v981 = vand.u32 %v649, 4294901760
        %982 = vmatpush1.msra.mxu0 %v981
        %v983 = vand.u32 %v652, 4294901760
        %984 = vmatprep.subr.mxu0 %v983
        %v985 = vand.u32 %v651, 4294901760
        %986 = vmatpush1.msra.mxu0 %v985
        %v987 = vand.u32 %v668, 4294901760
        %988 = vmatprep.subr.mxu0 %v987
        %v989 = vand.u32 %v665, 4294901760
        %990 = vmatpush1.msra.mxu0 %v989
        %991 = vmatprep.subr.mxu0 0.0
        %992 = vmatpush1.msra.mxu0 0.0
        %993 = vmatprep.subr.mxu0 0.0
        %994 = vmatpush1.msra.mxu0 0.0
        %995 = vmatprep.subr.mxu0 0.0
        %996 = vmatpush1.msra.mxu0 0.0
        %997 = vmatprep.subr.mxu0 0.0
        %998 = vmatpush1.msra.mxu0 0.0
        %999 = vmatprep.subr.mxu0 0.0
        %1000 = vmatpush1.msra.mxu0 0.0
        %1001 = vmatprep.subr.mxu0 0.0
        %1002 = vmatpush1.msra.mxu0 0.0
        %1003 = vmatprep.subr.mxu0 0.0
        %1004 = vmatpush1.msra.mxu0 0.0
        %1005 = vmatprep.subr.mxu0 0.0
        %1006 = vmatpush1.msra.mxu0 0.0
        %1007 = vmatprep.subr.mxu0 0.0
        %1008 = vmatpush1.msra.mxu0 0.0
        %1009 = vmatprep.subr.mxu0 0.0
        %1010 = vmatpush1.msra.mxu0 0.0
        %1011 = vmatprep.subr.mxu0 0.0
        %1012 = vmatpush1.msra.mxu0 0.0
        %1013 = vmatprep.subr.mxu0 0.0
        %1014 = vmatpush1.msra.mxu0 0.0
        %1015 = vmatprep.subr.mxu0 0.0
        %1016 = vmatpush1.msra.mxu0 0.0
        %1017 = vmatprep.subr.mxu0 0.0
        %1018 = vmatpush1.msra.mxu0 0.0
        %1019 = vmatprep.subr.mxu0 0.0
        %1020 = vmatpush1.msra.mxu0 0.0
        %1021 = vmatprep.subr.mxu0 0.0
        %1022 = vmatpush1.msra.mxu0 0.0
        %1023 = vmatprep.subr.mxu0 0.0
        %1024 = vmatpush1.msra.mxu0 0.0
        %1025 = vmatprep.subr.mxu0 0.0
        %1026 = vmatpush1.msra.mxu0 0.0
        %1027 = vmatprep.subr.mxu0 0.0
        %1028 = vmatpush1.msra.mxu0 0.0
        %1029 = vmatprep.subr.mxu0 0.0
        %1030 = vmatpush1.msra.mxu0 0.0
        %1031 = vmatprep.subr.mxu0 0.0
        %1032 = vmatpush1.msra.mxu0 0.0
        %1033 = vmatprep.subr.mxu0 0.0
        %1034 = vmatpush1.msra.mxu0 0.0
        %1035 = vmatprep.subr.mxu0 0.0
        %1036 = vmatpush1.msra.mxu0 0.0
        %1037 = vmatprep.subr.mxu0 0.0
        %1038 = vmatpush1.msra.mxu0 0.0
        %1039 = vmatprep.subr.mxu0 0.0
        %1040 = vmatpush1.msra.mxu0 0.0
        %1041 = vmatprep.subr.mxu0 0.0
        %1042 = vmatpush1.msra.mxu0 0.0
        %1043 = vmatprep.subr.mxu0 0.0
        %1044 = vmatpush1.msra.mxu0 0.0
        %1045 = vmatprep.mubr.f32.mxu0 0.0
        %v1046 = vand.u32 %v662, 4294901760
        %v1047 = vsub.f32 %v662, %v1046
        %v1048 = vand.u32 %v1047, 4294901760
        %1049 = vmatmul.mubr.f32.gmra.mrb[0].mxu0 %v1048
        %v1050 = vpop.f32.mrb[0].mxu0
        %v1051 = vadd.f32 %v967, %v1050
        %v1052 = vpop.f32.mrb[0].mxu0
        %v1053 = vadd.f32 %v969, %v1052
        %1054 = vdwg.mxu0
        %v1055 = vand.u32 %v646, 4294901760
        %v1056 = vsub.f32 %v646, %v1055
        %v1057 = vand.u32 %v1056, 4294901760
        %1058 = vmatprep.subr.mxu0 %v1057
        %v1059 = vand.u32 %v645, 4294901760
        %v1060 = vsub.f32 %v645, %v1059
        %v1061 = vand.u32 %v1060, 4294901760
        %1062 = vmatpush1.msra.mxu0 %v1061
        %v1063 = vand.u32 %v648, 4294901760
        %v1064 = vsub.f32 %v648, %v1063
        %v1065 = vand.u32 %v1064, 4294901760
        %1066 = vmatprep.subr.mxu0 %v1065
        %v1067 = vand.u32 %v647, 4294901760
        %v1068 = vsub.f32 %v647, %v1067
        %v1069 = vand.u32 %v1068, 4294901760
        %1070 = vmatpush1.msra.mxu0 %v1069
        %v1071 = vand.u32 %v650, 4294901760
        %v1072 = vsub.f32 %v650, %v1071
        %v1073 = vand.u32 %v1072, 4294901760
        %1074 = vmatprep.subr.mxu0 %v1073
        %v1075 = vand.u32 %v649, 4294901760
        %v1076 = vsub.f32 %v649, %v1075
        %v1077 = vand.u32 %v1076, 4294901760
        %1078 = vmatpush1.msra.mxu0 %v1077
        %v1079 = vand.u32 %v652, 4294901760
        %v1080 = vsub.f32 %v652, %v1079
        %v1081 = vand.u32 %v1080, 4294901760
        %1082 = vmatprep.subr.mxu0 %v1081
        %v1083 = vand.u32 %v651, 4294901760
        %v1084 = vsub.f32 %v651, %v1083
        %v1085 = vand.u32 %v1084, 4294901760
        %1086 = vmatpush1.msra.mxu0 %v1085
        %v1087 = vand.u32 %v668, 4294901760
        %v1088 = vsub.f32 %v668, %v1087
        %v1089 = vand.u32 %v1088, 4294901760
        %1090 = vmatprep.subr.mxu0 %v1089
        %v1091 = vand.u32 %v665, 4294901760
        %v1092 = vsub.f32 %v665, %v1091
        %v1093 = vand.u32 %v1092, 4294901760
        %1094 = vmatpush1.msra.mxu0 %v1093
        %1095 = vmatprep.subr.mxu0 0.0
        %1096 = vmatpush1.msra.mxu0 0.0
        %1097 = vmatprep.subr.mxu0 0.0
        %1098 = vmatpush1.msra.mxu0 0.0
        %1099 = vmatprep.subr.mxu0 0.0
        %1100 = vmatpush1.msra.mxu0 0.0
        %1101 = vmatprep.subr.mxu0 0.0
        %1102 = vmatpush1.msra.mxu0 0.0
        %1103 = vmatprep.subr.mxu0 0.0
        %1104 = vmatpush1.msra.mxu0 0.0
        %1105 = vmatprep.subr.mxu0 0.0
        %1106 = vmatpush1.msra.mxu0 0.0
        %1107 = vmatprep.subr.mxu0 0.0
        %1108 = vmatpush1.msra.mxu0 0.0
        %1109 = vmatprep.subr.mxu0 0.0
        %1110 = vmatpush1.msra.mxu0 0.0
        %1111 = vmatprep.subr.mxu0 0.0
        %1112 = vmatpush1.msra.mxu0 0.0
        %1113 = vmatprep.subr.mxu0 0.0
        %1114 = vmatpush1.msra.mxu0 0.0
        %1115 = vmatprep.subr.mxu0 0.0
        %1116 = vmatpush1.msra.mxu0 0.0
        %1117 = vmatprep.subr.mxu0 0.0
        %1118 = vmatpush1.msra.mxu0 0.0
        %1119 = vmatprep.subr.mxu0 0.0
        %1120 = vmatpush1.msra.mxu0 0.0
        %1121 = vmatprep.subr.mxu0 0.0
        %1122 = vmatpush1.msra.mxu0 0.0
        %1123 = vmatprep.subr.mxu0 0.0
        %1124 = vmatpush1.msra.mxu0 0.0
        %1125 = vmatprep.subr.mxu0 0.0
        %1126 = vmatpush1.msra.mxu0 0.0
        %1127 = vmatprep.subr.mxu0 0.0
        %1128 = vmatpush1.msra.mxu0 0.0
        %1129 = vmatprep.subr.mxu0 0.0
        %1130 = vmatpush1.msra.mxu0 0.0
        %1131 = vmatprep.subr.mxu0 0.0
        %1132 = vmatpush1.msra.mxu0 0.0
        %1133 = vmatprep.subr.mxu0 0.0
        %1134 = vmatpush1.msra.mxu0 0.0
        %1135 = vmatprep.subr.mxu0 0.0
        %1136 = vmatpush1.msra.mxu0 0.0
        %1137 = vmatprep.subr.mxu0 0.0
        %1138 = vmatpush1.msra.mxu0 0.0
        %1139 = vmatprep.subr.mxu0 0.0
        %1140 = vmatpush1.msra.mxu0 0.0
        %1141 = vmatprep.subr.mxu0 0.0
        %1142 = vmatpush1.msra.mxu0 0.0
        %1143 = vmatprep.subr.mxu0 0.0
        %1144 = vmatpush1.msra.mxu0 0.0
        %1145 = vmatprep.subr.mxu0 0.0
        %1146 = vmatpush1.msra.mxu0 0.0
        %1147 = vmatprep.subr.mxu0 0.0
        %1148 = vmatpush1.msra.mxu0 0.0
        %1149 = vmatprep.mubr.f32.mxu0 0.0
        %v1150 = vand.u32 %v662, 4294901760
        %1151 = vmatmul.mubr.f32.gmra.mrb[0].mxu0 %v1150
        %v1152 = vpop.f32.mrb[0].mxu0
        %v1153 = vadd.f32 %v1051, %v1152
        %v1154 = vpop.f32.mrb[0].mxu0
        %v1155 = vadd.f32 %v1053, %v1154
        %1156 = vdwg.mxu0
        %v1157 = vand.u32 %v646, 4294901760
        %1158 = vmatprep.subr.mxu0 %v1157
        %v1159 = vand.u32 %v645, 4294901760
        %1160 = vmatpush1.msra.mxu0 %v1159
        %v1161 = vand.u32 %v648, 4294901760
        %1162 = vmatprep.subr.mxu0 %v1161
        %v1163 = vand.u32 %v647, 4294901760
        %1164 = vmatpush1.msra.mxu0 %v1163
        %v1165 = vand.u32 %v650, 4294901760
        %1166 = vmatprep.subr.mxu0 %v1165
        %v1167 = vand.u32 %v649, 4294901760
        %1168 = vmatpush1.msra.mxu0 %v1167
        %v1169 = vand.u32 %v652, 4294901760
        %1170 = vmatprep.subr.mxu0 %v1169
        %v1171 = vand.u32 %v651, 4294901760
        %1172 = vmatpush1.msra.mxu0 %v1171
        %v1173 = vand.u32 %v668, 4294901760
        %1174 = vmatprep.subr.mxu0 %v1173
        %v1175 = vand.u32 %v665, 4294901760
        %1176 = vmatpush1.msra.mxu0 %v1175
        %1177 = vmatprep.subr.mxu0 0.0
        %1178 = vmatpush1.msra.mxu0 0.0
        %1179 = vmatprep.subr.mxu0 0.0
        %1180 = vmatpush1.msra.mxu0 0.0
        %1181 = vmatprep.subr.mxu0 0.0
        %1182 = vmatpush1.msra.mxu0 0.0
        %1183 = vmatprep.subr.mxu0 0.0
        %1184 = vmatpush1.msra.mxu0 0.0
        %1185 = vmatprep.subr.mxu0 0.0
        %1186 = vmatpush1.msra.mxu0 0.0
        %1187 = vmatprep.subr.mxu0 0.0
        %1188 = vmatpush1.msra.mxu0 0.0
        %1189 = vmatprep.subr.mxu0 0.0
        %1190 = vmatpush1.msra.mxu0 0.0
        %1191 = vmatprep.subr.mxu0 0.0
        %1192 = vmatpush1.msra.mxu0 0.0
        %1193 = vmatprep.subr.mxu0 0.0
        %1194 = vmatpush1.msra.mxu0 0.0
        %1195 = vmatprep.subr.mxu0 0.0
        %1196 = vmatpush1.msra.mxu0 0.0
        %1197 = vmatprep.subr.mxu0 0.0
        %1198 = vmatpush1.msra.mxu0 0.0
        %1199 = vmatprep.subr.mxu0 0.0
        %1200 = vmatpush1.msra.mxu0 0.0
        %1201 = vmatprep.subr.mxu0 0.0
        %1202 = vmatpush1.msra.mxu0 0.0
        %1203 = vmatprep.subr.mxu0 0.0
        %1204 = vmatpush1.msra.mxu0 0.0
        %1205 = vmatprep.subr.mxu0 0.0
        %1206 = vmatpush1.msra.mxu0 0.0
        %1207 = vmatprep.subr.mxu0 0.0
        %1208 = vmatpush1.msra.mxu0 0.0
        %1209 = vmatprep.subr.mxu0 0.0
        %1210 = vmatpush1.msra.mxu0 0.0
        %1211 = vmatprep.subr.mxu0 0.0
        %1212 = vmatpush1.msra.mxu0 0.0
        %1213 = vmatprep.subr.mxu0 0.0
        %1214 = vmatpush1.msra.mxu0 0.0
        %1215 = vmatprep.subr.mxu0 0.0
        %1216 = vmatpush1.msra.mxu0 0.0
        %1217 = vmatprep.subr.mxu0 0.0
        %1218 = vmatpush1.msra.mxu0 0.0
        %1219 = vmatprep.subr.mxu0 0.0
        %1220 = vmatpush1.msra.mxu0 0.0
        %1221 = vmatprep.subr.mxu0 0.0
        %1222 = vmatpush1.msra.mxu0 0.0
        %1223 = vmatprep.subr.mxu0 0.0
        %1224 = vmatpush1.msra.mxu0 0.0
        %1225 = vmatprep.subr.mxu0 0.0
        %1226 = vmatpush1.msra.mxu0 0.0
        %1227 = vmatprep.subr.mxu0 0.0
        %1228 = vmatpush1.msra.mxu0 0.0
        %1229 = vmatprep.subr.mxu0 0.0
        %1230 = vmatpush1.msra.mxu0 0.0
        %1231 = vmatprep.mubr.f32.mxu0 0.0
        %v1232 = vand.u32 %v662, 4294901760
        %1233 = vmatmul.mubr.f32.gmra.mrb[0].mxu0 %v1232
        %v1234 = vpop.f32.mrb[0].mxu0
        %v1235 = vadd.f32 %v1153, %v1234
        %v1236 = vpop.f32.mrb[0].mxu0
        %v1237 = vadd.f32 %v1155, %v1236
        %1238 = vdwg.mxu0
        %v1239 = vld [vmem:[%s421] sm:$0xff]
        %v1240 = vld [vmem:[%s425] sm:$0xff]
        %v1241 = vadd.f32 %v1235, %v1237
        %1242 = vadd.xlane.f32.xlu0 %v1241
        %v1243 = vpop.xlane.xlu0 %1242
        %v1244 = vmul.f32 %v1243, %v465
        %v1245 = vsub.f32 %v1235, %v1244
        %v1246 = vsub.f32 %v1237, %v1244
        %v1247 = vmul.f32 %v1245, %v1245
        %v1248 = vmul.f32 %v1246, %v1246
        %v1249 = vadd.f32 %v1247, %v1248
        %1250 = vadd.xlane.f32.xlu0 %v1249
        %v1251 = vpop.xlane.xlu0 %1250
        %v1252 = vmul.f32 %v1251, %v465
        %v1253 = vadd.f32 %v1239, 1.0
        %v1254 = vadd.f32 %v1252, 1e-05
        %v1255 = vrsqrt.pop %v1254
        %v1256 = vmul.f32 %v1245, %v1255
        %v1257 = vmul.f32 %v1246, %v1255
        %1259 = vset.pattern.permute.xlu0 0
        %1260 = vperm.xlu0 %1259, %v1253
        %v1261 = vpop.permute.xlu0 %1260
        %v1263 = vmul.f32 %v1261, %v1256
        %v1264 = vmul.f32 %v1261, %v1257
        %1266 = vset.pattern.permute.xlu0 0
        %1267 = vperm.xlu0 %1266, %v1240
        %v1268 = vpop.permute.xlu0 %1267
        %v1270 = vadd.f32 %v1263, %v1268
        %v1271 = vadd.f32 %v1264, %v1268
        %vm1272 = vcmp.ge.f32.partialorder %v1270, 0.0
        %vm1273 = vcmp.ge.f32.partialorder %v1271, 0.0
        %v1274 = vmul.f32 %v1270, 0.2
        %v1275 = vmul.f32 %v1271, 0.2
        %v1276 = vsel %vm1272, %v1270, %v1274
        %v1277 = vsel %vm1273, %v1271, %v1275
        %1279 = vrot.lane.b32.xlu0 %v1276, 112
        %v1280 = vpop.permute.xlu0 %1279
        %1283 = vrot.lane.b32.xlu0 %v1276, 16
        %v1284 = vpop.permute.xlu0 %1283
        %1285 = vrot.lane.b32.xlu0 %v1277, 16
        %v1286 = vpop.permute.xlu0 %1285
        %v1287 = vsel %vm532, %v1284, %v1286
        %v1290 = vsel %vm532, %v1280, %v1284
        %1291 = vrot.lane.b32.xlu0 %v1287, 1
        %v1292 = vpop.permute.xlu0 %1291
        %1295 = vrot.lane.b32.xlu0 %v1290, 1
        %v1296 = vpop.permute.xlu0 %1295
        %v1297 = vsel %vm542, %v1296, %v1292
        %v1300 = vsel %vm542, %v1292, %v1296
        %1301 = vrot.lane.b32.xlu0 %v1290, 127
        %v1302 = vpop.permute.xlu0 %1301
        %1303 = vrot.lane.b32.xlu0 %v1287, 127
        %v1304 = vpop.permute.xlu0 %1303
        %v1305 = vsel %vm551, %v1302, %v1304
        %v1309 = vsel %vm551, %v1304, %v1302
        %v1310 = vsel %vm561, %v1305, %v1300
        %v1311 = vsel %vm562, %v1309, %v1297
        %v1312 = vsel %vm569, %v1300, %v1305
        %v1313 = vsel %vm570, %v1297, %v1309
        %1314 = vrot.lane.b32.xlu0 %v1277, 1
        %v1315 = vpop.permute.xlu0 %1314
        %1317 = vrot.lane.b32.xlu0 %v1276, 1
        %v1318 = vpop.permute.xlu0 %1317
        %v1319 = vsel %vm542, %v1318, %v1315
        %v1322 = vsel %vm542, %v1315, %v1318
        %1323 = vrot.lane.b32.xlu0 %v1276, 127
        %v1324 = vpop.permute.xlu0 %1323
        %1325 = vrot.lane.b32.xlu0 %v1277, 127
        %v1326 = vpop.permute.xlu0 %1325
        %v1327 = vsel %vm551, %v1324, %v1326
        %v1331 = vsel %vm551, %v1326, %v1324
        %v1332 = vsel %vm561, %v1327, %v1322
        %v1333 = vsel %vm562, %v1331, %v1319
        %v1334 = vsel %vm569, %v1322, %v1327
        %v1335 = vsel %vm570, %v1319, %v1331
        %1336 = vrot.lane.b32.xlu0 %v1277, 112
        %v1337 = vpop.permute.xlu0 %1336
        %v1338 = vsel %vm597, %v1280, %v1337
        %v1342 = vsel %vm597, %v1337, %v1286
        %1344 = vrot.lane.b32.xlu0 %v1342, 1
        %v1345 = vpop.permute.xlu0 %1344
        %1347 = vrot.lane.b32.xlu0 %v1338, 1
        %v1348 = vpop.permute.xlu0 %1347
        %v1349 = vsel %vm542, %v1348, %v1345
        %v1352 = vsel %vm542, %v1345, %v1348
        %1353 = vrot.lane.b32.xlu0 %v1338, 127
        %v1354 = vpop.permute.xlu0 %1353
        %1355 = vrot.lane.b32.xlu0 %v1342, 127
        %v1356 = vpop.permute.xlu0 %1355
        %v1357 = vsel %vm551, %v1354, %v1356
        %v1361 = vsel %vm551, %v1356, %v1354
        %v1362 = vsel %vm561, %v1357, %v1352
        %v1363 = vsel %vm562, %v1361, %v1349
        %v1364 = vsel %vm569, %v1352, %v1357
        %v1365 = vsel %vm570, %v1349, %v1361
        %v1366 = vld [vmem:[%s7] sm:$0xff]
        %v1367 = vld [vmem:[%s8] sm:$0xff]
        %1369 = vset.pattern.permute.xlu0 0
        %1370 = vperm.xlu0 %1369, %v1367
        %v1371 = vpop.permute.xlu0 %1370
        %vm1373 = vcmask 588800
        %v1375 = vsel %vm1373, %v1366, 0
        %v1377 = vand.u32 %v1311, 4294901760
        %1378 = vmatprep.subr.mxu0 %v1377
        %v1379 = vand.u32 %v1310, 4294901760
        %1380 = vmatpush1.msra.mxu0 %v1379
        %v1381 = vand.u32 %v1287, 4294901760
        %1382 = vmatprep.subr.mxu0 %v1381
        %v1383 = vand.u32 %v1290, 4294901760
        %1384 = vmatpush1.msra.mxu0 %v1383
        %v1385 = vand.u32 %v1313, 4294901760
        %1386 = vmatprep.subr.mxu0 %v1385
        %v1387 = vand.u32 %v1312, 4294901760
        %1388 = vmatpush1.msra.mxu0 %v1387
        %v1389 = vand.u32 %v1333, 4294901760
        %1390 = vmatprep.subr.mxu0 %v1389
        %v1391 = vand.u32 %v1332, 4294901760
        %1392 = vmatpush1.msra.mxu0 %v1391
        %v1393 = vand.u32 %v1277, 4294901760
        %1394 = vmatprep.subr.mxu0 %v1393
        %v1395 = vand.u32 %v1276, 4294901760
        %1396 = vmatpush1.msra.mxu0 %v1395
        %v1397 = vand.u32 %v1335, 4294901760
        %1398 = vmatprep.subr.mxu0 %v1397
        %v1399 = vand.u32 %v1334, 4294901760
        %1400 = vmatpush1.msra.mxu0 %v1399
        %v1401 = vand.u32 %v1363, 4294901760
        %1402 = vmatprep.subr.mxu0 %v1401
        %v1403 = vand.u32 %v1362, 4294901760
        %1404 = vmatpush1.msra.mxu0 %v1403
        %v1405 = vand.u32 %v1342, 4294901760
        %1406 = vmatprep.subr.mxu0 %v1405
        %v1407 = vand.u32 %v1338, 4294901760
        %1408 = vmatpush1.msra.mxu0 %v1407
        %v1409 = vand.u32 %v1365, 4294901760
        %1410 = vmatprep.subr.mxu0 %v1409
        %v1411 = vand.u32 %v1364, 4294901760
        %1412 = vmatpush1.msra.mxu0 %v1411
        %1413 = vmatprep.subr.mxu0 0.0
        %1414 = vmatpush1.msra.mxu0 0.0
        %1415 = vmatprep.subr.mxu0 0.0
        %1416 = vmatpush1.msra.mxu0 0.0
        %1417 = vmatprep.subr.mxu0 0.0
        %1418 = vmatpush1.msra.mxu0 0.0
        %1419 = vmatprep.subr.mxu0 0.0
        %1420 = vmatpush1.msra.mxu0 0.0
        %1421 = vmatprep.subr.mxu0 0.0
        %1422 = vmatpush1.msra.mxu0 0.0
        %1423 = vmatprep.subr.mxu0 0.0
        %1424 = vmatpush1.msra.mxu0 0.0
        %1425 = vmatprep.subr.mxu0 0.0
        %1426 = vmatpush1.msra.mxu0 0.0
        %1427 = vmatprep.subr.mxu0 0.0
        %1428 = vmatpush1.msra.mxu0 0.0
        %1429 = vmatprep.subr.mxu0 0.0
        %1430 = vmatpush1.msra.mxu0 0.0
        %1431 = vmatprep.subr.mxu0 0.0
        %1432 = vmatpush1.msra.mxu0 0.0
        %1433 = vmatprep.subr.mxu0 0.0
        %1434 = vmatpush1.msra.mxu0 0.0
        %1435 = vmatprep.subr.mxu0 0.0
        %1436 = vmatpush1.msra.mxu0 0.0
        %1437 = vmatprep.subr.mxu0 0.0
        %1438 = vmatpush1.msra.mxu0 0.0
        %1439 = vmatprep.subr.mxu0 0.0
        %1440 = vmatpush1.msra.mxu0 0.0
        %1441 = vmatprep.subr.mxu0 0.0
        %1442 = vmatpush1.msra.mxu0 0.0
        %1443 = vmatprep.subr.mxu0 0.0
        %1444 = vmatpush1.msra.mxu0 0.0
        %1445 = vmatprep.subr.mxu0 0.0
        %1446 = vmatpush1.msra.mxu0 0.0
        %1447 = vmatprep.subr.mxu0 0.0
        %1448 = vmatpush1.msra.mxu0 0.0
        %1449 = vmatprep.subr.mxu0 0.0
        %1450 = vmatpush1.msra.mxu0 0.0
        %1451 = vmatprep.subr.mxu0 0.0
        %1452 = vmatpush1.msra.mxu0 0.0
        %1453 = vmatprep.subr.mxu0 0.0
        %1454 = vmatpush1.msra.mxu0 0.0
        %1455 = vmatprep.subr.mxu0 0.0
        %1456 = vmatpush1.msra.mxu0 0.0
        %1457 = vmatprep.subr.mxu0 0.0
        %1458 = vmatpush1.msra.mxu0 0.0
        %1459 = vmatprep.mubr.f32.mxu0 0.0
        %v1460 = vand.u32 %v1375, 4294901760
        %v1461 = vsub.f32 %v1375, %v1460
        %v1462 = vand.u32 %v1461, 4294901760
        %v1463 = vsub.f32 %v1461, %v1462
        %v1464 = vand.u32 %v1463, 4294901760
        %1465 = vmatmul.mubr.f32.gmra.mrb[0].mxu0 %v1464
        %v1466 = vpop.f32.mrb[0].mxu0
        %v1467 = vadd.f32 %v1371, %v1466
        %v1468 = vpop.f32.mrb[0].mxu0
        %v1469 = vadd.f32 %v1371, %v1468
        %1470 = vdwg.mxu0
        %v1471 = vand.u32 %v1311, 4294901760
        %v1472 = vsub.f32 %v1311, %v1471
        %v1473 = vand.u32 %v1472, 4294901760
        %v1474 = vsub.f32 %v1472, %v1473
        %v1475 = vand.u32 %v1474, 4294901760
        %1476 = vmatprep.subr.mxu0 %v1475
        %v1477 = vand.u32 %v1310, 4294901760
        %v1478 = vsub.f32 %v1310, %v1477
        %v1479 = vand.u32 %v1478, 4294901760
        %v1480 = vsub.f32 %v1478, %v1479
        %v1481 = vand.u32 %v1480, 4294901760
        %1482 = vmatpush1.msra.mxu0 %v1481
        %v1483 = vand.u32 %v1287, 4294901760
        %v1484 = vsub.f32 %v1287, %v1483
        %v1485 = vand.u32 %v1484, 4294901760
        %v1486 = vsub.f32 %v1484, %v1485
        %v1487 = vand.u32 %v1486, 4294901760
        %1488 = vmatprep.subr.mxu0 %v1487
        %v1489 = vand.u32 %v1290, 4294901760
        %v1490 = vsub.f32 %v1290, %v1489
        %v1491 = vand.u32 %v1490, 4294901760
        %v1492 = vsub.f32 %v1490, %v1491
        %v1493 = vand.u32 %v1492, 4294901760
        %1494 = vmatpush1.msra.mxu0 %v1493
        %v1495 = vand.u32 %v1313, 4294901760
        %v1496 = vsub.f32 %v1313, %v1495
        %v1497 = vand.u32 %v1496, 4294901760
        %v1498 = vsub.f32 %v1496, %v1497
        %v1499 = vand.u32 %v1498, 4294901760
        %1500 = vmatprep.subr.mxu0 %v1499
        %v1501 = vand.u32 %v1312, 4294901760
        %v1502 = vsub.f32 %v1312, %v1501
        %v1503 = vand.u32 %v1502, 4294901760
        %v1504 = vsub.f32 %v1502, %v1503
        %v1505 = vand.u32 %v1504, 4294901760
        %1506 = vmatpush1.msra.mxu0 %v1505
        %v1507 = vand.u32 %v1333, 4294901760
        %v1508 = vsub.f32 %v1333, %v1507
        %v1509 = vand.u32 %v1508, 4294901760
        %v1510 = vsub.f32 %v1508, %v1509
        %v1511 = vand.u32 %v1510, 4294901760
        %1512 = vmatprep.subr.mxu0 %v1511
        %v1513 = vand.u32 %v1332, 4294901760
        %v1514 = vsub.f32 %v1332, %v1513
        %v1515 = vand.u32 %v1514, 4294901760
        %v1516 = vsub.f32 %v1514, %v1515
        %v1517 = vand.u32 %v1516, 4294901760
        %1518 = vmatpush1.msra.mxu0 %v1517
        %v1519 = vand.u32 %v1277, 4294901760
        %v1520 = vsub.f32 %v1277, %v1519
        %v1521 = vand.u32 %v1520, 4294901760
        %v1522 = vsub.f32 %v1520, %v1521
        %v1523 = vand.u32 %v1522, 4294901760
        %1524 = vmatprep.subr.mxu0 %v1523
        %v1525 = vand.u32 %v1276, 4294901760
        %v1526 = vsub.f32 %v1276, %v1525
        %v1527 = vand.u32 %v1526, 4294901760
        %v1528 = vsub.f32 %v1526, %v1527
        %v1529 = vand.u32 %v1528, 4294901760
        %1530 = vmatpush1.msra.mxu0 %v1529
        %v1531 = vand.u32 %v1335, 4294901760
        %v1532 = vsub.f32 %v1335, %v1531
        %v1533 = vand.u32 %v1532, 4294901760
        %v1534 = vsub.f32 %v1532, %v1533
        %v1535 = vand.u32 %v1534, 4294901760
        %1536 = vmatprep.subr.mxu0 %v1535
        %v1537 = vand.u32 %v1334, 4294901760
        %v1538 = vsub.f32 %v1334, %v1537
        %v1539 = vand.u32 %v1538, 4294901760
        %v1540 = vsub.f32 %v1538, %v1539
        %v1541 = vand.u32 %v1540, 4294901760
        %1542 = vmatpush1.msra.mxu0 %v1541
        %v1543 = vand.u32 %v1363, 4294901760
        %v1544 = vsub.f32 %v1363, %v1543
        %v1545 = vand.u32 %v1544, 4294901760
        %v1546 = vsub.f32 %v1544, %v1545
        %v1547 = vand.u32 %v1546, 4294901760
        %1548 = vmatprep.subr.mxu0 %v1547
        %v1549 = vand.u32 %v1362, 4294901760
        %v1550 = vsub.f32 %v1362, %v1549
        %v1551 = vand.u32 %v1550, 4294901760
        %v1552 = vsub.f32 %v1550, %v1551
        %v1553 = vand.u32 %v1552, 4294901760
        %1554 = vmatpush1.msra.mxu0 %v1553
        %v1555 = vand.u32 %v1342, 4294901760
        %v1556 = vsub.f32 %v1342, %v1555
        %v1557 = vand.u32 %v1556, 4294901760
        %v1558 = vsub.f32 %v1556, %v1557
        %v1559 = vand.u32 %v1558, 4294901760
        %1560 = vmatprep.subr.mxu0 %v1559
        %v1561 = vand.u32 %v1338, 4294901760
        %v1562 = vsub.f32 %v1338, %v1561
        %v1563 = vand.u32 %v1562, 4294901760
        %v1564 = vsub.f32 %v1562, %v1563
        %v1565 = vand.u32 %v1564, 4294901760
        %1566 = vmatpush1.msra.mxu0 %v1565
        %v1567 = vand.u32 %v1365, 4294901760
        %v1568 = vsub.f32 %v1365, %v1567
        %v1569 = vand.u32 %v1568, 4294901760
        %v1570 = vsub.f32 %v1568, %v1569
        %v1571 = vand.u32 %v1570, 4294901760
        %1572 = vmatprep.subr.mxu0 %v1571
        %v1573 = vand.u32 %v1364, 4294901760
        %v1574 = vsub.f32 %v1364, %v1573
        %v1575 = vand.u32 %v1574, 4294901760
        %v1576 = vsub.f32 %v1574, %v1575
        %v1577 = vand.u32 %v1576, 4294901760
        %1578 = vmatpush1.msra.mxu0 %v1577
        %1579 = vmatprep.subr.mxu0 0.0
        %1580 = vmatpush1.msra.mxu0 0.0
        %1581 = vmatprep.subr.mxu0 0.0
        %1582 = vmatpush1.msra.mxu0 0.0
        %1583 = vmatprep.subr.mxu0 0.0
        %1584 = vmatpush1.msra.mxu0 0.0
        %1585 = vmatprep.subr.mxu0 0.0
        %1586 = vmatpush1.msra.mxu0 0.0
        %1587 = vmatprep.subr.mxu0 0.0
        %1588 = vmatpush1.msra.mxu0 0.0
        %1589 = vmatprep.subr.mxu0 0.0
        %1590 = vmatpush1.msra.mxu0 0.0
        %1591 = vmatprep.subr.mxu0 0.0
        %1592 = vmatpush1.msra.mxu0 0.0
        %1593 = vmatprep.subr.mxu0 0.0
        %1594 = vmatpush1.msra.mxu0 0.0
        %1595 = vmatprep.subr.mxu0 0.0
        %1596 = vmatpush1.msra.mxu0 0.0
        %1597 = vmatprep.subr.mxu0 0.0
        %1598 = vmatpush1.msra.mxu0 0.0
        %1599 = vmatprep.subr.mxu0 0.0
        %1600 = vmatpush1.msra.mxu0 0.0
        %1601 = vmatprep.subr.mxu0 0.0
        %1602 = vmatpush1.msra.mxu0 0.0
        %1603 = vmatprep.subr.mxu0 0.0
        %1604 = vmatpush1.msra.mxu0 0.0
        %1605 = vmatprep.subr.mxu0 0.0
        %1606 = vmatpush1.msra.mxu0 0.0
        %1607 = vmatprep.subr.mxu0 0.0
        %1608 = vmatpush1.msra.mxu0 0.0
        %1609 = vmatprep.subr.mxu0 0.0
        %1610 = vmatpush1.msra.mxu0 0.0
        %1611 = vmatprep.subr.mxu0 0.0
        %1612 = vmatpush1.msra.mxu0 0.0
        %1613 = vmatprep.subr.mxu0 0.0
        %1614 = vmatpush1.msra.mxu0 0.0
        %1615 = vmatprep.subr.mxu0 0.0
        %1616 = vmatpush1.msra.mxu0 0.0
        %1617 = vmatprep.subr.mxu0 0.0
        %1618 = vmatpush1.msra.mxu0 0.0
        %1619 = vmatprep.subr.mxu0 0.0
        %1620 = vmatpush1.msra.mxu0 0.0
        %1621 = vmatprep.subr.mxu0 0.0
        %1622 = vmatpush1.msra.mxu0 0.0
        %1623 = vmatprep.subr.mxu0 0.0
        %1624 = vmatpush1.msra.mxu0 0.0
        %1625 = vmatprep.mubr.f32.mxu0 0.0
        %v1626 = vand.u32 %v1375, 4294901760
        %1627 = vmatmul.mubr.f32.gmra.mrb[0].mxu0 %v1626
        %v1628 = vpop.f32.mrb[0].mxu0
        %v1629 = vadd.f32 %v1467, %v1628
        %v1630 = vpop.f32.mrb[0].mxu0
        %v1631 = vadd.f32 %v1469, %v1630
        %1632 = vdwg.mxu0
        %v1633 = vand.u32 %v1311, 4294901760
        %v1634 = vsub.f32 %v1311, %v1633
        %1635 = vmatprep.subr.mxu0 %v1634
        %v1636 = vand.u32 %v1310, 4294901760
        %v1637 = vsub.f32 %v1310, %v1636
        %1638 = vmatpush1.msra.mxu0 %v1637
        %v1639 = vand.u32 %v1287, 4294901760
        %v1640 = vsub.f32 %v1287, %v1639
        %1641 = vmatprep.subr.mxu0 %v1640
        %v1642 = vand.u32 %v1290, 4294901760
        %v1643 = vsub.f32 %v1290, %v1642
        %1644 = vmatpush1.msra.mxu0 %v1643
        %v1645 = vand.u32 %v1313, 4294901760
        %v1646 = vsub.f32 %v1313, %v1645
        %1647 = vmatprep.subr.mxu0 %v1646
        %v1648 = vand.u32 %v1312, 4294901760
        %v1649 = vsub.f32 %v1312, %v1648
        %1650 = vmatpush1.msra.mxu0 %v1649
        %v1651 = vand.u32 %v1333, 4294901760
        %v1652 = vsub.f32 %v1333, %v1651
        %1653 = vmatprep.subr.mxu0 %v1652
        %v1654 = vand.u32 %v1332, 4294901760
        %v1655 = vsub.f32 %v1332, %v1654
        %1656 = vmatpush1.msra.mxu0 %v1655
        %v1657 = vand.u32 %v1277, 4294901760
        %v1658 = vsub.f32 %v1277, %v1657
        %1659 = vmatprep.subr.mxu0 %v1658
        %v1660 = vand.u32 %v1276, 4294901760
        %v1661 = vsub.f32 %v1276, %v1660
        %1662 = vmatpush1.msra.mxu0 %v1661
        %v1663 = vand.u32 %v1335, 4294901760
        %v1664 = vsub.f32 %v1335, %v1663
        %1665 = vmatprep.subr.mxu0 %v1664
        %v1666 = vand.u32 %v1334, 4294901760
        %v1667 = vsub.f32 %v1334, %v1666
        %1668 = vmatpush1.msra.mxu0 %v1667
        %v1669 = vand.u32 %v1363, 4294901760
        %v1670 = vsub.f32 %v1363, %v1669
        %1671 = vmatprep.subr.mxu0 %v1670
        %v1672 = vand.u32 %v1362, 4294901760
        %v1673 = vsub.f32 %v1362, %v1672
        %1674 = vmatpush1.msra.mxu0 %v1673
        %v1675 = vand.u32 %v1342, 4294901760
        %v1676 = vsub.f32 %v1342, %v1675
        %1677 = vmatprep.subr.mxu0 %v1676
        %v1678 = vand.u32 %v1338, 4294901760
        %v1679 = vsub.f32 %v1338, %v1678
        %1680 = vmatpush1.msra.mxu0 %v1679
        %v1681 = vand.u32 %v1365, 4294901760
        %v1682 = vsub.f32 %v1365, %v1681
        %1683 = vmatprep.subr.mxu0 %v1682
        %v1684 = vand.u32 %v1364, 4294901760
        %v1685 = vsub.f32 %v1364, %v1684
        %1686 = vmatpush1.msra.mxu0 %v1685
        %1687 = vmatprep.subr.mxu0 0.0
        %1688 = vmatpush1.msra.mxu0 0.0
        %1689 = vmatprep.subr.mxu0 0.0
        %1690 = vmatpush1.msra.mxu0 0.0
        %1691 = vmatprep.subr.mxu0 0.0
        %1692 = vmatpush1.msra.mxu0 0.0
        %1693 = vmatprep.subr.mxu0 0.0
        %1694 = vmatpush1.msra.mxu0 0.0
        %1695 = vmatprep.subr.mxu0 0.0
        %1696 = vmatpush1.msra.mxu0 0.0
        %1697 = vmatprep.subr.mxu0 0.0
        %1698 = vmatpush1.msra.mxu0 0.0
        %1699 = vmatprep.subr.mxu0 0.0
        %1700 = vmatpush1.msra.mxu0 0.0
        %1701 = vmatprep.subr.mxu0 0.0
        %1702 = vmatpush1.msra.mxu0 0.0
        %1703 = vmatprep.subr.mxu0 0.0
        %1704 = vmatpush1.msra.mxu0 0.0
        %1705 = vmatprep.subr.mxu0 0.0
        %1706 = vmatpush1.msra.mxu0 0.0
        %1707 = vmatprep.subr.mxu0 0.0
        %1708 = vmatpush1.msra.mxu0 0.0
        %1709 = vmatprep.subr.mxu0 0.0
        %1710 = vmatpush1.msra.mxu0 0.0
        %1711 = vmatprep.subr.mxu0 0.0
        %1712 = vmatpush1.msra.mxu0 0.0
        %1713 = vmatprep.subr.mxu0 0.0
        %1714 = vmatpush1.msra.mxu0 0.0
        %1715 = vmatprep.subr.mxu0 0.0
        %1716 = vmatpush1.msra.mxu0 0.0
        %1717 = vmatprep.subr.mxu0 0.0
        %1718 = vmatpush1.msra.mxu0 0.0
        %1719 = vmatprep.subr.mxu0 0.0
        %1720 = vmatpush1.msra.mxu0 0.0
        %1721 = vmatprep.subr.mxu0 0.0
        %1722 = vmatpush1.msra.mxu0 0.0
        %1723 = vmatprep.subr.mxu0 0.0
        %1724 = vmatpush1.msra.mxu0 0.0
        %1725 = vmatprep.subr.mxu0 0.0
        %1726 = vmatpush1.msra.mxu0 0.0
        %1727 = vmatprep.subr.mxu0 0.0
        %1728 = vmatpush1.msra.mxu0 0.0
        %1729 = vmatprep.subr.mxu0 0.0
        %1730 = vmatpush1.msra.mxu0 0.0
        %1731 = vmatprep.subr.mxu0 0.0
        %1732 = vmatpush1.msra.mxu0 0.0
        %1733 = vmatprep.mubr.f32.mxu0 0.0
        %v1734 = vand.u32 %v1375, 4294901760
        %v1735 = vsub.f32 %v1375, %v1734
        %1736 = vmatmul.mubr.f32.gmra.mrb[0].mxu0 %v1735
        %v1737 = vpop.f32.mrb[0].mxu0
        %v1738 = vadd.f32 %v1629, %v1737
        %v1739 = vpop.f32.mrb[0].mxu0
        %v1740 = vadd.f32 %v1631, %v1739
        %1741 = vdwg.mxu0
        %v1742 = vand.u32 %v1311, 4294901760
        %1743 = vmatprep.subr.mxu0 %v1742
        %v1744 = vand.u32 %v1310, 4294901760
        %1745 = vmatpush1.msra.mxu0 %v1744
        %v1746 = vand.u32 %v1287, 4294901760
        %1747 = vmatprep.subr.mxu0 %v1746
        %v1748 = vand.u32 %v1290, 4294901760
        %1749 = vmatpush1.msra.mxu0 %v1748
        %v1750 = vand.u32 %v1313, 4294901760
        %1751 = vmatprep.subr.mxu0 %v1750
        %v1752 = vand.u32 %v1312, 4294901760
        %1753 = vmatpush1.msra.mxu0 %v1752
        %v1754 = vand.u32 %v1333, 4294901760
        %1755 = vmatprep.subr.mxu0 %v1754
        %v1756 = vand.u32 %v1332, 4294901760
        %1757 = vmatpush1.msra.mxu0 %v1756
        %v1758 = vand.u32 %v1277, 4294901760
        %1759 = vmatprep.subr.mxu0 %v1758
        %v1760 = vand.u32 %v1276, 4294901760
        %1761 = vmatpush1.msra.mxu0 %v1760
        %v1762 = vand.u32 %v1335, 4294901760
        %1763 = vmatprep.subr.mxu0 %v1762
        %v1764 = vand.u32 %v1334, 4294901760
        %1765 = vmatpush1.msra.mxu0 %v1764
        %v1766 = vand.u32 %v1363, 4294901760
        %1767 = vmatprep.subr.mxu0 %v1766
        %v1768 = vand.u32 %v1362, 4294901760
        %1769 = vmatpush1.msra.mxu0 %v1768
        %v1770 = vand.u32 %v1342, 4294901760
        %1771 = vmatprep.subr.mxu0 %v1770
        %v1772 = vand.u32 %v1338, 4294901760
        %1773 = vmatpush1.msra.mxu0 %v1772
        %v1774 = vand.u32 %v1365, 4294901760
        %1775 = vmatprep.subr.mxu0 %v1774
        %v1776 = vand.u32 %v1364, 4294901760
        %1777 = vmatpush1.msra.mxu0 %v1776
        %1778 = vmatprep.subr.mxu0 0.0
        %1779 = vmatpush1.msra.mxu0 0.0
        %1780 = vmatprep.subr.mxu0 0.0
        %1781 = vmatpush1.msra.mxu0 0.0
        %1782 = vmatprep.subr.mxu0 0.0
        %1783 = vmatpush1.msra.mxu0 0.0
        %1784 = vmatprep.subr.mxu0 0.0
        %1785 = vmatpush1.msra.mxu0 0.0
        %1786 = vmatprep.subr.mxu0 0.0
        %1787 = vmatpush1.msra.mxu0 0.0
        %1788 = vmatprep.subr.mxu0 0.0
        %1789 = vmatpush1.msra.mxu0 0.0
        %1790 = vmatprep.subr.mxu0 0.0
        %1791 = vmatpush1.msra.mxu0 0.0
        %1792 = vmatprep.subr.mxu0 0.0
        %1793 = vmatpush1.msra.mxu0 0.0
        %1794 = vmatprep.subr.mxu0 0.0
        %1795 = vmatpush1.msra.mxu0 0.0
        %1796 = vmatprep.subr.mxu0 0.0
        %1797 = vmatpush1.msra.mxu0 0.0
        %1798 = vmatprep.subr.mxu0 0.0
        %1799 = vmatpush1.msra.mxu0 0.0
        %1800 = vmatprep.subr.mxu0 0.0
        %1801 = vmatpush1.msra.mxu0 0.0
        %1802 = vmatprep.subr.mxu0 0.0
        %1803 = vmatpush1.msra.mxu0 0.0
        %1804 = vmatprep.subr.mxu0 0.0
        %1805 = vmatpush1.msra.mxu0 0.0
        %1806 = vmatprep.subr.mxu0 0.0
        %1807 = vmatpush1.msra.mxu0 0.0
        %1808 = vmatprep.subr.mxu0 0.0
        %1809 = vmatpush1.msra.mxu0 0.0
        %1810 = vmatprep.subr.mxu0 0.0
        %1811 = vmatpush1.msra.mxu0 0.0
        %1812 = vmatprep.subr.mxu0 0.0
        %1813 = vmatpush1.msra.mxu0 0.0
        %1814 = vmatprep.subr.mxu0 0.0
        %1815 = vmatpush1.msra.mxu0 0.0
        %1816 = vmatprep.subr.mxu0 0.0
        %1817 = vmatpush1.msra.mxu0 0.0
        %1818 = vmatprep.subr.mxu0 0.0
        %1819 = vmatpush1.msra.mxu0 0.0
        %1820 = vmatprep.subr.mxu0 0.0
        %1821 = vmatpush1.msra.mxu0 0.0
        %1822 = vmatprep.subr.mxu0 0.0
        %1823 = vmatpush1.msra.mxu0 0.0
        %1824 = vmatprep.mubr.f32.mxu0 0.0
        %v1825 = vand.u32 %v1375, 4294901760
        %v1826 = vsub.f32 %v1375, %v1825
        %v1827 = vand.u32 %v1826, 4294901760
        %1828 = vmatmul.mubr.f32.gmra.mrb[0].mxu0 %v1827
        %v1829 = vpop.f32.mrb[0].mxu0
        %v1830 = vadd.f32 %v1738, %v1829
        %v1831 = vpop.f32.mrb[0].mxu0
        %v1832 = vadd.f32 %v1740, %v1831
        %1833 = vdwg.mxu0
        %v1834 = vand.u32 %v1311, 4294901760
        %v1835 = vsub.f32 %v1311, %v1834
        %v1836 = vand.u32 %v1835, 4294901760
        %1837 = vmatprep.subr.mxu0 %v1836
        %v1838 = vand.u32 %v1310, 4294901760
        %v1839 = vsub.f32 %v1310, %v1838
        %v1840 = vand.u32 %v1839, 4294901760
        %1841 = vmatpush1.msra.mxu0 %v1840
        %v1842 = vand.u32 %v1287, 4294901760
        %v1843 = vsub.f32 %v1287, %v1842
        %v1844 = vand.u32 %v1843, 4294901760
        %1845 = vmatprep.subr.mxu0 %v1844
        %v1846 = vand.u32 %v1290, 4294901760
        %v1847 = vsub.f32 %v1290, %v1846
        %v1848 = vand.u32 %v1847, 4294901760
        %1849 = vmatpush1.msra.mxu0 %v1848
        %v1850 = vand.u32 %v1313, 4294901760
        %v1851 = vsub.f32 %v1313, %v1850
        %v1852 = vand.u32 %v1851, 4294901760
        %1853 = vmatprep.subr.mxu0 %v1852
        %v1854 = vand.u32 %v1312, 4294901760
        %v1855 = vsub.f32 %v1312, %v1854
        %v1856 = vand.u32 %v1855, 4294901760
        %1857 = vmatpush1.msra.mxu0 %v1856
        %v1858 = vand.u32 %v1333, 4294901760
        %v1859 = vsub.f32 %v1333, %v1858
        %v1860 = vand.u32 %v1859, 4294901760
        %1861 = vmatprep.subr.mxu0 %v1860
        %v1862 = vand.u32 %v1332, 4294901760
        %v1863 = vsub.f32 %v1332, %v1862
        %v1864 = vand.u32 %v1863, 4294901760
        %1865 = vmatpush1.msra.mxu0 %v1864
        %v1866 = vand.u32 %v1277, 4294901760
        %v1867 = vsub.f32 %v1277, %v1866
        %v1868 = vand.u32 %v1867, 4294901760
        %1869 = vmatprep.subr.mxu0 %v1868
        %v1870 = vand.u32 %v1276, 4294901760
        %v1871 = vsub.f32 %v1276, %v1870
        %v1872 = vand.u32 %v1871, 4294901760
        %1873 = vmatpush1.msra.mxu0 %v1872
        %v1874 = vand.u32 %v1335, 4294901760
        %v1875 = vsub.f32 %v1335, %v1874
        %v1876 = vand.u32 %v1875, 4294901760
        %1877 = vmatprep.subr.mxu0 %v1876
        %v1878 = vand.u32 %v1334, 4294901760
        %v1879 = vsub.f32 %v1334, %v1878
        %v1880 = vand.u32 %v1879, 4294901760
        %1881 = vmatpush1.msra.mxu0 %v1880
        %v1882 = vand.u32 %v1363, 4294901760
        %v1883 = vsub.f32 %v1363, %v1882
        %v1884 = vand.u32 %v1883, 4294901760
        %1885 = vmatprep.subr.mxu0 %v1884
        %v1886 = vand.u32 %v1362, 4294901760
        %v1887 = vsub.f32 %v1362, %v1886
        %v1888 = vand.u32 %v1887, 4294901760
        %1889 = vmatpush1.msra.mxu0 %v1888
        %v1890 = vand.u32 %v1342, 4294901760
        %v1891 = vsub.f32 %v1342, %v1890
        %v1892 = vand.u32 %v1891, 4294901760
        %1893 = vmatprep.subr.mxu0 %v1892
        %v1894 = vand.u32 %v1338, 4294901760
        %v1895 = vsub.f32 %v1338, %v1894
        %v1896 = vand.u32 %v1895, 4294901760
        %1897 = vmatpush1.msra.mxu0 %v1896
        %v1898 = vand.u32 %v1365, 4294901760
        %v1899 = vsub.f32 %v1365, %v1898
        %v1900 = vand.u32 %v1899, 4294901760
        %1901 = vmatprep.subr.mxu0 %v1900
        %v1902 = vand.u32 %v1364, 4294901760
        %v1903 = vsub.f32 %v1364, %v1902
        %v1904 = vand.u32 %v1903, 4294901760
        %1905 = vmatpush1.msra.mxu0 %v1904
        %1906 = vmatprep.subr.mxu0 0.0
        %1907 = vmatpush1.msra.mxu0 0.0
        %1908 = vmatprep.subr.mxu0 0.0
        %1909 = vmatpush1.msra.mxu0 0.0
        %1910 = vmatprep.subr.mxu0 0.0
        %1911 = vmatpush1.msra.mxu0 0.0
        %1912 = vmatprep.subr.mxu0 0.0
        %1913 = vmatpush1.msra.mxu0 0.0
        %1914 = vmatprep.subr.mxu0 0.0
        %1915 = vmatpush1.msra.mxu0 0.0
        %1916 = vmatprep.subr.mxu0 0.0
        %1917 = vmatpush1.msra.mxu0 0.0
        %1918 = vmatprep.subr.mxu0 0.0
        %1919 = vmatpush1.msra.mxu0 0.0
        %1920 = vmatprep.subr.mxu0 0.0
        %1921 = vmatpush1.msra.mxu0 0.0
        %1922 = vmatprep.subr.mxu0 0.0
        %1923 = vmatpush1.msra.mxu0 0.0
        %1924 = vmatprep.subr.mxu0 0.0
        %1925 = vmatpush1.msra.mxu0 0.0
        %1926 = vmatprep.subr.mxu0 0.0
        %1927 = vmatpush1.msra.mxu0 0.0
        %1928 = vmatprep.subr.mxu0 0.0
        %1929 = vmatpush1.msra.mxu0 0.0
        %1930 = vmatprep.subr.mxu0 0.0
        %1931 = vmatpush1.msra.mxu0 0.0
        %1932 = vmatprep.subr.mxu0 0.0
        %1933 = vmatpush1.msra.mxu0 0.0
        %1934 = vmatprep.subr.mxu0 0.0
        %1935 = vmatpush1.msra.mxu0 0.0
        %1936 = vmatprep.subr.mxu0 0.0
        %1937 = vmatpush1.msra.mxu0 0.0
        %1938 = vmatprep.subr.mxu0 0.0
        %1939 = vmatpush1.msra.mxu0 0.0
        %1940 = vmatprep.subr.mxu0 0.0
        %1941 = vmatpush1.msra.mxu0 0.0
        %1942 = vmatprep.subr.mxu0 0.0
        %1943 = vmatpush1.msra.mxu0 0.0
        %1944 = vmatprep.subr.mxu0 0.0
        %1945 = vmatpush1.msra.mxu0 0.0
        %1946 = vmatprep.subr.mxu0 0.0
        %1947 = vmatpush1.msra.mxu0 0.0
        %1948 = vmatprep.subr.mxu0 0.0
        %1949 = vmatpush1.msra.mxu0 0.0
        %1950 = vmatprep.subr.mxu0 0.0
        %1951 = vmatpush1.msra.mxu0 0.0
        %1952 = vmatprep.mubr.f32.mxu0 0.0
        %v1953 = vand.u32 %v1375, 4294901760
        %1954 = vmatmul.mubr.f32.gmra.mrb[0].mxu0 %v1953
        %v1955 = vpop.f32.mrb[0].mxu0
        %v1956 = vadd.f32 %v1830, %v1955
        %v1957 = vpop.f32.mrb[0].mxu0
        %v1958 = vadd.f32 %v1832, %v1957
        %1959 = vdwg.mxu0
        %v1960 = vand.u32 %v1311, 4294901760
        %1961 = vmatprep.subr.mxu0 %v1960
        %v1962 = vand.u32 %v1310, 4294901760
        %1963 = vmatpush1.msra.mxu0 %v1962
        %v1964 = vand.u32 %v1287, 4294901760
        %1965 = vmatprep.subr.mxu0 %v1964
        %v1966 = vand.u32 %v1290, 4294901760
        %1967 = vmatpush1.msra.mxu0 %v1966
        %v1968 = vand.u32 %v1313, 4294901760
        %1969 = vmatprep.subr.mxu0 %v1968
        %v1970 = vand.u32 %v1312, 4294901760
        %1971 = vmatpush1.msra.mxu0 %v1970
        %v1972 = vand.u32 %v1333, 4294901760
        %1973 = vmatprep.subr.mxu0 %v1972
        %v1974 = vand.u32 %v1332, 4294901760
        %1975 = vmatpush1.msra.mxu0 %v1974
        %v1976 = vand.u32 %v1277, 4294901760
        %1977 = vmatprep.subr.mxu0 %v1976
        %v1978 = vand.u32 %v1276, 4294901760
        %1979 = vmatpush1.msra.mxu0 %v1978
        %v1980 = vand.u32 %v1335, 4294901760
        %1981 = vmatprep.subr.mxu0 %v1980
        %v1982 = vand.u32 %v1334, 4294901760
        %1983 = vmatpush1.msra.mxu0 %v1982
        %v1984 = vand.u32 %v1363, 4294901760
        %1985 = vmatprep.subr.mxu0 %v1984
        %v1986 = vand.u32 %v1362, 4294901760
        %1987 = vmatpush1.msra.mxu0 %v1986
        %v1988 = vand.u32 %v1342, 4294901760
        %1989 = vmatprep.subr.mxu0 %v1988
        %v1990 = vand.u32 %v1338, 4294901760
        %1991 = vmatpush1.msra.mxu0 %v1990
        %v1992 = vand.u32 %v1365, 4294901760
        %1993 = vmatprep.subr.mxu0 %v1992
        %v1994 = vand.u32 %v1364, 4294901760
        %1995 = vmatpush1.msra.mxu0 %v1994
        %1996 = vmatprep.subr.mxu0 0.0
        %1997 = vmatpush1.msra.mxu0 0.0
        %1998 = vmatprep.subr.mxu0 0.0
        %1999 = vmatpush1.msra.mxu0 0.0
        %2000 = vmatprep.subr.mxu0 0.0
        %2001 = vmatpush1.msra.mxu0 0.0
        %2002 = vmatprep.subr.mxu0 0.0
        %2003 = vmatpush1.msra.mxu0 0.0
        %2004 = vmatprep.subr.mxu0 0.0
        %2005 = vmatpush1.msra.mxu0 0.0
        %2006 = vmatprep.subr.mxu0 0.0
        %2007 = vmatpush1.msra.mxu0 0.0
        %2008 = vmatprep.subr.mxu0 0.0
        %2009 = vmatpush1.msra.mxu0 0.0
        %2010 = vmatprep.subr.mxu0 0.0
        %2011 = vmatpush1.msra.mxu0 0.0
        %2012 = vmatprep.subr.mxu0 0.0
        %2013 = vmatpush1.msra.mxu0 0.0
        %2014 = vmatprep.subr.mxu0 0.0
        %2015 = vmatpush1.msra.mxu0 0.0
        %2016 = vmatprep.subr.mxu0 0.0
        %2017 = vmatpush1.msra.mxu0 0.0
        %2018 = vmatprep.subr.mxu0 0.0
        %2019 = vmatpush1.msra.mxu0 0.0
        %2020 = vmatprep.subr.mxu0 0.0
        %2021 = vmatpush1.msra.mxu0 0.0
        %2022 = vmatprep.subr.mxu0 0.0
        %2023 = vmatpush1.msra.mxu0 0.0
        %2024 = vmatprep.subr.mxu0 0.0
        %2025 = vmatpush1.msra.mxu0 0.0
        %2026 = vmatprep.subr.mxu0 0.0
        %2027 = vmatpush1.msra.mxu0 0.0
        %2028 = vmatprep.subr.mxu0 0.0
        %2029 = vmatpush1.msra.mxu0 0.0
        %2030 = vmatprep.subr.mxu0 0.0
        %2031 = vmatpush1.msra.mxu0 0.0
        %2032 = vmatprep.subr.mxu0 0.0
        %2033 = vmatpush1.msra.mxu0 0.0
        %2034 = vmatprep.subr.mxu0 0.0
        %2035 = vmatpush1.msra.mxu0 0.0
        %2036 = vmatprep.subr.mxu0 0.0
        %2037 = vmatpush1.msra.mxu0 0.0
        %2038 = vmatprep.subr.mxu0 0.0
        %2039 = vmatpush1.msra.mxu0 0.0
        %2040 = vmatprep.subr.mxu0 0.0
        %2041 = vmatpush1.msra.mxu0 0.0
        %2042 = vmatprep.mubr.f32.mxu0 0.0
        %v2043 = vand.u32 %v1375, 4294901760
        %2044 = vmatmul.mubr.f32.gmra.mrb[0].mxu0 %v2043
        %v2045 = vpop.f32.mrb[0].mxu0
        %v2046 = vadd.f32 %v1956, %v2045
        %v2047 = vpop.f32.mrb[0].mxu0
        %v2048 = vadd.f32 %v1958, %v2047
        %2049 = vdwg.mxu0
        %v2050 = vld [vmem:[%s9] sm:$0xff]
        %vm2051 = vcmask 31744
        %v2053 = vsel %vm2051, %v2050, 0
        %v2055 = vsel %vm459, %v426, 0
        %v2057 = vsel %vm459, %v457, 0
        %v2059 = vand.u32 %v2057, 4294901760
        %2060 = vmatprep.subr.mxu0 %v2059
        %v2061 = vand.u32 %v2055, 4294901760
        %2062 = vmatpush1.msra.mxu0 %v2061
        %2063 = vmatprep.subr.mxu0 0.0
        %2064 = vmatpush1.msra.mxu0 0.0
        %2065 = vmatprep.subr.mxu0 0.0
        %2066 = vmatpush1.msra.mxu0 0.0
        %2067 = vmatprep.subr.mxu0 0.0
        %2068 = vmatpush1.msra.mxu0 0.0
        %2069 = vmatprep.subr.mxu0 0.0
        %2070 = vmatpush1.msra.mxu0 0.0
        %2071 = vmatprep.subr.mxu0 0.0
        %2072 = vmatpush1.msra.mxu0 0.0
        %2073 = vmatprep.subr.mxu0 0.0
        %2074 = vmatpush1.msra.mxu0 0.0
        %2075 = vmatprep.subr.mxu0 0.0
        %2076 = vmatpush1.msra.mxu0 0.0
        %2077 = vmatprep.subr.mxu0 0.0
        %2078 = vmatpush1.msra.mxu0 0.0
        %2079 = vmatprep.subr.mxu0 0.0
        %2080 = vmatpush1.msra.mxu0 0.0
        %2081 = vmatprep.subr.mxu0 0.0
        %2082 = vmatpush1.msra.mxu0 0.0
        %2083 = vmatprep.subr.mxu0 0.0
        %2084 = vmatpush1.msra.mxu0 0.0
        %2085 = vmatprep.subr.mxu0 0.0
        %2086 = vmatpush1.msra.mxu0 0.0
        %2087 = vmatprep.subr.mxu0 0.0
        %2088 = vmatpush1.msra.mxu0 0.0
        %2089 = vmatprep.subr.mxu0 0.0
        %2090 = vmatpush1.msra.mxu0 0.0
        %2091 = vmatprep.subr.mxu0 0.0
        %2092 = vmatpush1.msra.mxu0 0.0
        %2093 = vmatprep.subr.mxu0 0.0
        %2094 = vmatpush1.msra.mxu0 0.0
        %2095 = vmatprep.subr.mxu0 0.0
        %2096 = vmatpush1.msra.mxu0 0.0
        %2097 = vmatprep.subr.mxu0 0.0
        %2098 = vmatpush1.msra.mxu0 0.0
        %2099 = vmatprep.subr.mxu0 0.0
        %2100 = vmatpush1.msra.mxu0 0.0
        %2101 = vmatprep.subr.mxu0 0.0
        %2102 = vmatpush1.msra.mxu0 0.0
        %2103 = vmatprep.subr.mxu0 0.0
        %2104 = vmatpush1.msra.mxu0 0.0
        %2105 = vmatprep.subr.mxu0 0.0
        %2106 = vmatpush1.msra.mxu0 0.0
        %2107 = vmatprep.subr.mxu0 0.0
        %2108 = vmatpush1.msra.mxu0 0.0
        %2109 = vmatprep.subr.mxu0 0.0
        %2110 = vmatpush1.msra.mxu0 0.0
        %2111 = vmatprep.subr.mxu0 0.0
        %2112 = vmatpush1.msra.mxu0 0.0
        %2113 = vmatprep.subr.mxu0 0.0
        %2114 = vmatpush1.msra.mxu0 0.0
        %2115 = vmatprep.subr.mxu0 0.0
        %2116 = vmatpush1.msra.mxu0 0.0
        %2117 = vmatprep.subr.mxu0 0.0
        %2118 = vmatpush1.msra.mxu0 0.0
        %2119 = vmatprep.subr.mxu0 0.0
        %2120 = vmatpush1.msra.mxu0 0.0
        %2121 = vmatprep.subr.mxu0 0.0
        %2122 = vmatpush1.msra.mxu0 0.0
        %2123 = vmatprep.subr.mxu0 0.0
        %2124 = vmatpush1.msra.mxu0 0.0
        %2125 = vmatprep.mubr.f32.mxu0 0.0
        %v2126 = vand.u32 %v2053, 4294901760
        %v2127 = vsub.f32 %v2053, %v2126
        %v2128 = vand.u32 %v2127, 4294901760
        %v2129 = vsub.f32 %v2127, %v2128
        %v2130 = vand.u32 %v2129, 4294901760
        %2131 = vmatmul.mubr.f32.gmra.mrb[0].mxu0 %v2130
        %v2132 = vpop.f32.mrb[0].mxu0
        %v2133 = vadd.f32 0.0, %v2132
        %v2134 = vpop.f32.mrb[0].mxu0
        %v2135 = vadd.f32 0.0, %v2134
        %2136 = vdwg.mxu0
        %v2137 = vand.u32 %v2057, 4294901760
        %v2138 = vsub.f32 %v2057, %v2137
        %v2139 = vand.u32 %v2138, 4294901760
        %v2140 = vsub.f32 %v2138, %v2139
        %v2141 = vand.u32 %v2140, 4294901760
        %2142 = vmatprep.subr.mxu0 %v2141
        %v2143 = vand.u32 %v2055, 4294901760
        %v2144 = vsub.f32 %v2055, %v2143
        %v2145 = vand.u32 %v2144, 4294901760
        %v2146 = vsub.f32 %v2144, %v2145
        %v2147 = vand.u32 %v2146, 4294901760
        %2148 = vmatpush1.msra.mxu0 %v2147
        %2149 = vmatprep.subr.mxu0 0.0
        %2150 = vmatpush1.msra.mxu0 0.0
        %2151 = vmatprep.subr.mxu0 0.0
        %2152 = vmatpush1.msra.mxu0 0.0
        %2153 = vmatprep.subr.mxu0 0.0
        %2154 = vmatpush1.msra.mxu0 0.0
        %2155 = vmatprep.subr.mxu0 0.0
        %2156 = vmatpush1.msra.mxu0 0.0
        %2157 = vmatprep.subr.mxu0 0.0
        %2158 = vmatpush1.msra.mxu0 0.0
        %2159 = vmatprep.subr.mxu0 0.0
        %2160 = vmatpush1.msra.mxu0 0.0
        %2161 = vmatprep.subr.mxu0 0.0
        %2162 = vmatpush1.msra.mxu0 0.0
        %2163 = vmatprep.subr.mxu0 0.0
        %2164 = vmatpush1.msra.mxu0 0.0
        %2165 = vmatprep.subr.mxu0 0.0
        %2166 = vmatpush1.msra.mxu0 0.0
        %2167 = vmatprep.subr.mxu0 0.0
        %2168 = vmatpush1.msra.mxu0 0.0
        %2169 = vmatprep.subr.mxu0 0.0
        %2170 = vmatpush1.msra.mxu0 0.0
        %2171 = vmatprep.subr.mxu0 0.0
        %2172 = vmatpush1.msra.mxu0 0.0
        %2173 = vmatprep.subr.mxu0 0.0
        %2174 = vmatpush1.msra.mxu0 0.0
        %2175 = vmatprep.subr.mxu0 0.0
        %2176 = vmatpush1.msra.mxu0 0.0
        %2177 = vmatprep.subr.mxu0 0.0
        %2178 = vmatpush1.msra.mxu0 0.0
        %2179 = vmatprep.subr.mxu0 0.0
        %2180 = vmatpush1.msra.mxu0 0.0
        %2181 = vmatprep.subr.mxu0 0.0
        %2182 = vmatpush1.msra.mxu0 0.0
        %2183 = vmatprep.subr.mxu0 0.0
        %2184 = vmatpush1.msra.mxu0 0.0
        %2185 = vmatprep.subr.mxu0 0.0
        %2186 = vmatpush1.msra.mxu0 0.0
        %2187 = vmatprep.subr.mxu0 0.0
        %2188 = vmatpush1.msra.mxu0 0.0
        %2189 = vmatprep.subr.mxu0 0.0
        %2190 = vmatpush1.msra.mxu0 0.0
        %2191 = vmatprep.subr.mxu0 0.0
        %2192 = vmatpush1.msra.mxu0 0.0
        %2193 = vmatprep.subr.mxu0 0.0
        %2194 = vmatpush1.msra.mxu0 0.0
        %2195 = vmatprep.subr.mxu0 0.0
        %2196 = vmatpush1.msra.mxu0 0.0
        %2197 = vmatprep.subr.mxu0 0.0
        %2198 = vmatpush1.msra.mxu0 0.0
        %2199 = vmatprep.subr.mxu0 0.0
        %2200 = vmatpush1.msra.mxu0 0.0
        %2201 = vmatprep.subr.mxu0 0.0
        %2202 = vmatpush1.msra.mxu0 0.0
        %2203 = vmatprep.subr.mxu0 0.0
        %2204 = vmatpush1.msra.mxu0 0.0
        %2205 = vmatprep.subr.mxu0 0.0
        %2206 = vmatpush1.msra.mxu0 0.0
        %2207 = vmatprep.subr.mxu0 0.0
        %2208 = vmatpush1.msra.mxu0 0.0
        %2209 = vmatprep.subr.mxu0 0.0
        %2210 = vmatpush1.msra.mxu0 0.0
        %2211 = vmatprep.mubr.f32.mxu0 0.0
        %v2212 = vand.u32 %v2053, 4294901760
        %2213 = vmatmul.mubr.f32.gmra.mrb[0].mxu0 %v2212
        %v2214 = vpop.f32.mrb[0].mxu0
        %v2215 = vadd.f32 %v2133, %v2214
        %v2216 = vpop.f32.mrb[0].mxu0
        %v2217 = vadd.f32 %v2135, %v2216
        %2218 = vdwg.mxu0
        %v2219 = vand.u32 %v2057, 4294901760
        %v2220 = vsub.f32 %v2057, %v2219
        %2221 = vmatprep.subr.mxu0 %v2220
        %v2222 = vand.u32 %v2055, 4294901760
        %v2223 = vsub.f32 %v2055, %v2222
        %2224 = vmatpush1.msra.mxu0 %v2223
        %2225 = vmatprep.subr.mxu0 0.0
        %2226 = vmatpush1.msra.mxu0 0.0
        %2227 = vmatprep.subr.mxu0 0.0
        %2228 = vmatpush1.msra.mxu0 0.0
        %2229 = vmatprep.subr.mxu0 0.0
        %2230 = vmatpush1.msra.mxu0 0.0
        %2231 = vmatprep.subr.mxu0 0.0
        %2232 = vmatpush1.msra.mxu0 0.0
        %2233 = vmatprep.subr.mxu0 0.0
        %2234 = vmatpush1.msra.mxu0 0.0
        %2235 = vmatprep.subr.mxu0 0.0
        %2236 = vmatpush1.msra.mxu0 0.0
        %2237 = vmatprep.subr.mxu0 0.0
        %2238 = vmatpush1.msra.mxu0 0.0
        %2239 = vmatprep.subr.mxu0 0.0
        %2240 = vmatpush1.msra.mxu0 0.0
        %2241 = vmatprep.subr.mxu0 0.0
        %2242 = vmatpush1.msra.mxu0 0.0
        %2243 = vmatprep.subr.mxu0 0.0
        %2244 = vmatpush1.msra.mxu0 0.0
        %2245 = vmatprep.subr.mxu0 0.0
        %2246 = vmatpush1.msra.mxu0 0.0
        %2247 = vmatprep.subr.mxu0 0.0
        %2248 = vmatpush1.msra.mxu0 0.0
        %2249 = vmatprep.subr.mxu0 0.0
        %2250 = vmatpush1.msra.mxu0 0.0
        %2251 = vmatprep.subr.mxu0 0.0
        %2252 = vmatpush1.msra.mxu0 0.0
        %2253 = vmatprep.subr.mxu0 0.0
        %2254 = vmatpush1.msra.mxu0 0.0
        %2255 = vmatprep.subr.mxu0 0.0
        %2256 = vmatpush1.msra.mxu0 0.0
        %2257 = vmatprep.subr.mxu0 0.0
        %2258 = vmatpush1.msra.mxu0 0.0
        %2259 = vmatprep.subr.mxu0 0.0
        %2260 = vmatpush1.msra.mxu0 0.0
        %2261 = vmatprep.subr.mxu0 0.0
        %2262 = vmatpush1.msra.mxu0 0.0
        %2263 = vmatprep.subr.mxu0 0.0
        %2264 = vmatpush1.msra.mxu0 0.0
        %2265 = vmatprep.subr.mxu0 0.0
        %2266 = vmatpush1.msra.mxu0 0.0
        %2267 = vmatprep.subr.mxu0 0.0
        %2268 = vmatpush1.msra.mxu0 0.0
        %2269 = vmatprep.subr.mxu0 0.0
        %2270 = vmatpush1.msra.mxu0 0.0
        %2271 = vmatprep.subr.mxu0 0.0
        %2272 = vmatpush1.msra.mxu0 0.0
        %2273 = vmatprep.subr.mxu0 0.0
        %2274 = vmatpush1.msra.mxu0 0.0
        %2275 = vmatprep.subr.mxu0 0.0
        %2276 = vmatpush1.msra.mxu0 0.0
        %2277 = vmatprep.subr.mxu0 0.0
        %2278 = vmatpush1.msra.mxu0 0.0
        %2279 = vmatprep.subr.mxu0 0.0
        %2280 = vmatpush1.msra.mxu0 0.0
        %2281 = vmatprep.subr.mxu0 0.0
        %2282 = vmatpush1.msra.mxu0 0.0
        %2283 = vmatprep.subr.mxu0 0.0
        %2284 = vmatpush1.msra.mxu0 0.0
        %2285 = vmatprep.subr.mxu0 0.0
        %2286 = vmatpush1.msra.mxu0 0.0
        %2287 = vmatprep.mubr.f32.mxu0 0.0
        %v2288 = vand.u32 %v2053, 4294901760
        %v2289 = vsub.f32 %v2053, %v2288
        %2290 = vmatmul.mubr.f32.gmra.mrb[0].mxu0 %v2289
        %v2291 = vpop.f32.mrb[0].mxu0
        %v2292 = vadd.f32 %v2215, %v2291
        %v2293 = vpop.f32.mrb[0].mxu0
        %v2294 = vadd.f32 %v2217, %v2293
        %2295 = vdwg.mxu0
        %v2296 = vand.u32 %v2057, 4294901760
        %2297 = vmatprep.subr.mxu0 %v2296
        %v2298 = vand.u32 %v2055, 4294901760
        %2299 = vmatpush1.msra.mxu0 %v2298
        %2300 = vmatprep.subr.mxu0 0.0
        %2301 = vmatpush1.msra.mxu0 0.0
        %2302 = vmatprep.subr.mxu0 0.0
        %2303 = vmatpush1.msra.mxu0 0.0
        %2304 = vmatprep.subr.mxu0 0.0
        %2305 = vmatpush1.msra.mxu0 0.0
        %2306 = vmatprep.subr.mxu0 0.0
        %2307 = vmatpush1.msra.mxu0 0.0
        %2308 = vmatprep.subr.mxu0 0.0
        %2309 = vmatpush1.msra.mxu0 0.0
        %2310 = vmatprep.subr.mxu0 0.0
        %2311 = vmatpush1.msra.mxu0 0.0
        %2312 = vmatprep.subr.mxu0 0.0
        %2313 = vmatpush1.msra.mxu0 0.0
        %2314 = vmatprep.subr.mxu0 0.0
        %2315 = vmatpush1.msra.mxu0 0.0
        %2316 = vmatprep.subr.mxu0 0.0
        %2317 = vmatpush1.msra.mxu0 0.0
        %2318 = vmatprep.subr.mxu0 0.0
        %2319 = vmatpush1.msra.mxu0 0.0
        %2320 = vmatprep.subr.mxu0 0.0
        %2321 = vmatpush1.msra.mxu0 0.0
        %2322 = vmatprep.subr.mxu0 0.0
        %2323 = vmatpush1.msra.mxu0 0.0
        %2324 = vmatprep.subr.mxu0 0.0
        %2325 = vmatpush1.msra.mxu0 0.0
        %2326 = vmatprep.subr.mxu0 0.0
        %2327 = vmatpush1.msra.mxu0 0.0
        %2328 = vmatprep.subr.mxu0 0.0
        %2329 = vmatpush1.msra.mxu0 0.0
        %2330 = vmatprep.subr.mxu0 0.0
        %2331 = vmatpush1.msra.mxu0 0.0
        %2332 = vmatprep.subr.mxu0 0.0
        %2333 = vmatpush1.msra.mxu0 0.0
        %2334 = vmatprep.subr.mxu0 0.0
        %2335 = vmatpush1.msra.mxu0 0.0
        %2336 = vmatprep.subr.mxu0 0.0
        %2337 = vmatpush1.msra.mxu0 0.0
        %2338 = vmatprep.subr.mxu0 0.0
        %2339 = vmatpush1.msra.mxu0 0.0
        %2340 = vmatprep.subr.mxu0 0.0
        %2341 = vmatpush1.msra.mxu0 0.0
        %2342 = vmatprep.subr.mxu0 0.0
        %2343 = vmatpush1.msra.mxu0 0.0
        %2344 = vmatprep.subr.mxu0 0.0
        %2345 = vmatpush1.msra.mxu0 0.0
        %2346 = vmatprep.subr.mxu0 0.0
        %2347 = vmatpush1.msra.mxu0 0.0
        %2348 = vmatprep.subr.mxu0 0.0
        %2349 = vmatpush1.msra.mxu0 0.0
        %2350 = vmatprep.subr.mxu0 0.0
        %2351 = vmatpush1.msra.mxu0 0.0
        %2352 = vmatprep.subr.mxu0 0.0
        %2353 = vmatpush1.msra.mxu0 0.0
        %2354 = vmatprep.subr.mxu0 0.0
        %2355 = vmatpush1.msra.mxu0 0.0
        %2356 = vmatprep.subr.mxu0 0.0
        %2357 = vmatpush1.msra.mxu0 0.0
        %2358 = vmatprep.subr.mxu0 0.0
        %2359 = vmatpush1.msra.mxu0 0.0
        %2360 = vmatprep.subr.mxu0 0.0
        %2361 = vmatpush1.msra.mxu0 0.0
        %2362 = vmatprep.mubr.f32.mxu0 0.0
        %v2363 = vand.u32 %v2053, 4294901760
        %v2364 = vsub.f32 %v2053, %v2363
        %v2365 = vand.u32 %v2364, 4294901760
        %2366 = vmatmul.mubr.f32.gmra.mrb[0].mxu0 %v2365
        %v2367 = vpop.f32.mrb[0].mxu0
        %v2368 = vadd.f32 %v2292, %v2367
        %v2369 = vpop.f32.mrb[0].mxu0
        %v2370 = vadd.f32 %v2294, %v2369
        %2371 = vdwg.mxu0
        %v2372 = vand.u32 %v2057, 4294901760
        %v2373 = vsub.f32 %v2057, %v2372
        %v2374 = vand.u32 %v2373, 4294901760
        %2375 = vmatprep.subr.mxu0 %v2374
        %v2376 = vand.u32 %v2055, 4294901760
        %v2377 = vsub.f32 %v2055, %v2376
        %v2378 = vand.u32 %v2377, 4294901760
        %2379 = vmatpush1.msra.mxu0 %v2378
        %2380 = vmatprep.subr.mxu0 0.0
        %2381 = vmatpush1.msra.mxu0 0.0
        %2382 = vmatprep.subr.mxu0 0.0
        %2383 = vmatpush1.msra.mxu0 0.0
        %2384 = vmatprep.subr.mxu0 0.0
        %2385 = vmatpush1.msra.mxu0 0.0
        %2386 = vmatprep.subr.mxu0 0.0
        %2387 = vmatpush1.msra.mxu0 0.0
        %2388 = vmatprep.subr.mxu0 0.0
        %2389 = vmatpush1.msra.mxu0 0.0
        %2390 = vmatprep.subr.mxu0 0.0
        %2391 = vmatpush1.msra.mxu0 0.0
        %2392 = vmatprep.subr.mxu0 0.0
        %2393 = vmatpush1.msra.mxu0 0.0
        %2394 = vmatprep.subr.mxu0 0.0
        %2395 = vmatpush1.msra.mxu0 0.0
        %2396 = vmatprep.subr.mxu0 0.0
        %2397 = vmatpush1.msra.mxu0 0.0
        %2398 = vmatprep.subr.mxu0 0.0
        %2399 = vmatpush1.msra.mxu0 0.0
        %2400 = vmatprep.subr.mxu0 0.0
        %2401 = vmatpush1.msra.mxu0 0.0
        %2402 = vmatprep.subr.mxu0 0.0
        %2403 = vmatpush1.msra.mxu0 0.0
        %2404 = vmatprep.subr.mxu0 0.0
        %2405 = vmatpush1.msra.mxu0 0.0
        %2406 = vmatprep.subr.mxu0 0.0
        %2407 = vmatpush1.msra.mxu0 0.0
        %2408 = vmatprep.subr.mxu0 0.0
        %2409 = vmatpush1.msra.mxu0 0.0
        %2410 = vmatprep.subr.mxu0 0.0
        %2411 = vmatpush1.msra.mxu0 0.0
        %2412 = vmatprep.subr.mxu0 0.0
        %2413 = vmatpush1.msra.mxu0 0.0
        %2414 = vmatprep.subr.mxu0 0.0
        %2415 = vmatpush1.msra.mxu0 0.0
        %2416 = vmatprep.subr.mxu0 0.0
        %2417 = vmatpush1.msra.mxu0 0.0
        %2418 = vmatprep.subr.mxu0 0.0
        %2419 = vmatpush1.msra.mxu0 0.0
        %2420 = vmatprep.subr.mxu0 0.0
        %2421 = vmatpush1.msra.mxu0 0.0
        %2422 = vmatprep.subr.mxu0 0.0
        %2423 = vmatpush1.msra.mxu0 0.0
        %2424 = vmatprep.subr.mxu0 0.0
        %2425 = vmatpush1.msra.mxu0 0.0
        %2426 = vmatprep.subr.mxu0 0.0
        %2427 = vmatpush1.msra.mxu0 0.0
        %2428 = vmatprep.subr.mxu0 0.0
        %2429 = vmatpush1.msra.mxu0 0.0
        %2430 = vmatprep.subr.mxu0 0.0
        %2431 = vmatpush1.msra.mxu0 0.0
        %2432 = vmatprep.subr.mxu0 0.0
        %2433 = vmatpush1.msra.mxu0 0.0
        %2434 = vmatprep.subr.mxu0 0.0
        %2435 = vmatpush1.msra.mxu0 0.0
        %2436 = vmatprep.subr.mxu0 0.0
        %2437 = vmatpush1.msra.mxu0 0.0
        %2438 = vmatprep.subr.mxu0 0.0
        %2439 = vmatpush1.msra.mxu0 0.0
        %2440 = vmatprep.subr.mxu0 0.0
        %2441 = vmatpush1.msra.mxu0 0.0
        %2442 = vmatprep.mubr.f32.mxu0 0.0
        %v2443 = vand.u32 %v2053, 4294901760
        %2444 = vmatmul.mubr.f32.gmra.mrb[0].mxu0 %v2443
        %v2445 = vpop.f32.mrb[0].mxu0
        %v2446 = vadd.f32 %v2368, %v2445
        %v2447 = vpop.f32.mrb[0].mxu0
        %v2448 = vadd.f32 %v2370, %v2447
        %2449 = vdwg.mxu0
        %v2450 = vand.u32 %v2057, 4294901760
        %2451 = vmatprep.subr.mxu0 %v2450
        %v2452 = vand.u32 %v2055, 4294901760
        %2453 = vmatpush1.msra.mxu0 %v2452
        %2454 = vmatprep.subr.mxu0 0.0
        %2455 = vmatpush1.msra.mxu0 0.0
        %2456 = vmatprep.subr.mxu0 0.0
        %2457 = vmatpush1.msra.mxu0 0.0
        %2458 = vmatprep.subr.mxu0 0.0
        %2459 = vmatpush1.msra.mxu0 0.0
        %2460 = vmatprep.subr.mxu0 0.0
        %2461 = vmatpush1.msra.mxu0 0.0
        %2462 = vmatprep.subr.mxu0 0.0
        %2463 = vmatpush1.msra.mxu0 0.0
        %2464 = vmatprep.subr.mxu0 0.0
        %2465 = vmatpush1.msra.mxu0 0.0
        %2466 = vmatprep.subr.mxu0 0.0
        %2467 = vmatpush1.msra.mxu0 0.0
        %2468 = vmatprep.subr.mxu0 0.0
        %2469 = vmatpush1.msra.mxu0 0.0
        %2470 = vmatprep.subr.mxu0 0.0
        %2471 = vmatpush1.msra.mxu0 0.0
        %2472 = vmatprep.subr.mxu0 0.0
        %2473 = vmatpush1.msra.mxu0 0.0
        %2474 = vmatprep.subr.mxu0 0.0
        %2475 = vmatpush1.msra.mxu0 0.0
        %2476 = vmatprep.subr.mxu0 0.0
        %2477 = vmatpush1.msra.mxu0 0.0
        %2478 = vmatprep.subr.mxu0 0.0
        %2479 = vmatpush1.msra.mxu0 0.0
        %2480 = vmatprep.subr.mxu0 0.0
        %2481 = vmatpush1.msra.mxu0 0.0
        %2482 = vmatprep.subr.mxu0 0.0
        %2483 = vmatpush1.msra.mxu0 0.0
        %2484 = vmatprep.subr.mxu0 0.0
        %2485 = vmatpush1.msra.mxu0 0.0
        %2486 = vmatprep.subr.mxu0 0.0
        %2487 = vmatpush1.msra.mxu0 0.0
        %2488 = vmatprep.subr.mxu0 0.0
        %2489 = vmatpush1.msra.mxu0 0.0
        %2490 = vmatprep.subr.mxu0 0.0
        %2491 = vmatpush1.msra.mxu0 0.0
        %2492 = vmatprep.subr.mxu0 0.0
        %2493 = vmatpush1.msra.mxu0 0.0
        %2494 = vmatprep.subr.mxu0 0.0
        %2495 = vmatpush1.msra.mxu0 0.0
        %2496 = vmatprep.subr.mxu0 0.0
        %2497 = vmatpush1.msra.mxu0 0.0
        %2498 = vmatprep.subr.mxu0 0.0
        %2499 = vmatpush1.msra.mxu0 0.0
        %2500 = vmatprep.subr.mxu0 0.0
        %2501 = vmatpush1.msra.mxu0 0.0
        %2502 = vmatprep.subr.mxu0 0.0
        %2503 = vmatpush1.msra.mxu0 0.0
        %2504 = vmatprep.subr.mxu0 0.0
        %2505 = vmatpush1.msra.mxu0 0.0
        %2506 = vmatprep.subr.mxu0 0.0
        %2507 = vmatpush1.msra.mxu0 0.0
        %2508 = vmatprep.subr.mxu0 0.0
        %2509 = vmatpush1.msra.mxu0 0.0
        %2510 = vmatprep.subr.mxu0 0.0
        %2511 = vmatpush1.msra.mxu0 0.0
        %2512 = vmatprep.subr.mxu0 0.0
        %2513 = vmatpush1.msra.mxu0 0.0
        %2514 = vmatprep.subr.mxu0 0.0
        %2515 = vmatpush1.msra.mxu0 0.0
        %2516 = vmatprep.mubr.f32.mxu0 0.0
        %v2517 = vand.u32 %v2053, 4294901760
        %2518 = vmatmul.mubr.f32.gmra.mrb[0].mxu0 %v2517
        %v2519 = vpop.f32.mrb[0].mxu0
        %v2520 = vadd.f32 %v2446, %v2519
        %v2521 = vpop.f32.mrb[0].mxu0
        %v2522 = vadd.f32 %v2448, %v2521
        %2523 = vdwg.mxu0
        %v2524 = vadd.f32 %v2046, %v2520
        %v2525 = vadd.f32 %v2048, %v2522
        %v2526 = vmul.f32 %v2524, 0.70710677
        %v2527 = vmul.f32 %v2525, 0.70710677
        %2528 = vst [vmem:[%s404] sm:$0xff] %v2526
        %2529 = vst [vmem:[%s404 + $0x8] sm:$0xff] %v2527
        %s2530 = sand.u32 %s267, 1
        %s2531 = scalar_lea.sflag [#allocation3], %s2530
        %s2532 = sand.u32 %s267, 1
        %s2533 = smul.addr %s2532, 16
        %s2534 = scalar_lea.vmem [#allocation2], %s2533
        // Predicated region
        $region61: #{tpu_custom_call.1} parent=59 // pred_check
          %p2535 = pneg %p277
        $region62: #{tpu_custom_call.1} parent=59 // pred_check_branch
          %2537 = sbr.rel (%p2535) target = $region64
        $region63: #{tpu_custom_call.1} parent=59 // pred_region
          %s2539 = ssub.s32 256, 256
          %2540 = vsyncadd %s2531, %s2539
          %s2541 = smul.addr %s24, 2
          %s2542 = smul.addr %s2541, 128
          %s2543 = scalar_lea.hbm %s10, %s2542
          %s2545 = sshll.u32 %s2534, 4
          %s2546 = int_to_ptr.vmem [resolvable:$true] %s2545
          %2548 = dma.vmem_to_hbm [thread:$0]  %s2546, 256, %s2543, %s2531
        $region64: #{tpu_custom_call.1} parent=59 // pred_fallthru
          _
      $region60: #{tpu_custom_call.1} parent=5 // pred_fallthru
        _
      %p2549 = scmp.le.s32.totalorder 2, %s19
      // Predicated region
      $region65: #{tpu_custom_call.1} parent=5 // pred_check
        %p2550 = pneg %p2549
      $region66: #{tpu_custom_call.1} parent=5 // pred_check_branch
        %2552 = sbr.rel (%p2550) target = $region68
      $region67: #{tpu_custom_call.1} parent=5 // pred_region
        %s2553 = ssub.s32 %s19, 2
        // Predicated region
        $region69: #{tpu_custom_call.1} parent=67 // pred_check
          %p2554 = pneg %p283
        $region70: #{tpu_custom_call.1} parent=67 // pred_check_branch
          %2556 = sbr.rel (%p2554) target = $region72
        $region71: #{tpu_custom_call.1} parent=67 // pred_region
          %s2557 = sand.u32 %s268, 1
          %s2558 = scalar_lea.sflag [#allocation3], %s2557
          %s2559 = sand.u32 %s268, 1
          %s2560 = smul.addr %s2559, 16
          %s2561 = scalar_lea.vmem [#allocation2], %s2560
          %2562 = dma.done %s2558, 256
        $region72: #{tpu_custom_call.1} parent=67 // pred_fallthru
          _
      $region68: #{tpu_custom_call.1} parent=5 // pred_fallthru
        _
    $region6: #{tpu_custom_call.1} parent=1 // loop_footer
      %s23 = sadd.s32 1, %s19
    $region7: #{tpu_custom_call.1} parent=1 // loop_footer_branch
      %18 = sbr.rel target = $region3
    $region8: #{tpu_custom_call.1} parent=1 // loop_exit
      _
    %2563 = vsyncpa [#allocation3], 1
    %s2564 = scalar_lea.sflag [#allocation3], 1
    %2565 = vsyncpa %s2564, 1

</llo_original>
